<compile_context>
chip_gen: v6e
topology: v6e:2x2x1
jax: 0.10.0
libtpu: 0.0.40
codegen_flags: <defaults>
</compile_context>

<pallas_src>
import functools

import jax
import jax.numpy as jnp
import numpy as np
from jax.experimental import pallas as pl
from jax.experimental.pallas import tpu as pltpu

LEAKY_SLOPE = 0.01  # torch.nn.LeakyReLU default negative_slope


def _make_kernel(d, k, hidden, n_layers, flips, tile):
    """Kernel body with the static flow configuration baked in (batch on lanes)."""
    dk = d - k
    H = hidden
    H2 = 2 * hidden
    n_chunks = tile // 128
    log_norm_const = float(-0.5 * d * np.log(2.0 * np.pi))

    def kernel(xT_ref, wslab_ref, b2_ref, out_ref):
        # The (d+2, tile) output block doubles as the working state:
        #   rows [0:d)  = current x / final z^T  (batch on lanes)
        #   row  d      = log_pz (written in the epilogue)
        #   row  d+1    = accumulated log|det J|
        out_ref[0:d, :] = xT_ref[...].astype(jnp.float32)
        out_ref[d + 1:d + 2, :] = jnp.zeros((1, tile), jnp.float32)

        for i in range(n_layers):                          # static unroll over layers
            flip = flips[i]
            if flip:
                a0, a1, b0, b1 = k, d, 0, k                # net-input rows / transformed rows
            else:
                a0, a1, b0, b1 = 0, k, k, d
            n_in = a1 - a0                                 # == k (asserted when flipped)

            W = wslab_ref[i]                               # (2H, k+1+dk): [W1^T | b1 | W2]
            # ---- hoisted per-layer lane-broadcasts, reused by every 128-lane chunk ----
            b1_b = jnp.broadcast_to(W[:, k:k + 1], (H2, 128))
            w1_b = [jnp.broadcast_to(W[:, c:c + 1], (H2, 128)) for c in range(k)]
            w2s_b = [jnp.broadcast_to(W[:H, k + 1 + j:k + 2 + j], (H, 128)) for j in range(dk)]
            w2m_b = [jnp.broadcast_to(W[H:, k + 1 + j:k + 2 + j], (H, 128)) for j in range(dk)]
            # ---- second-layer biases: scalar reads from SMEM ----
            b2s = [b2_ref[i * 2 * dk + j] for j in range(dk)]
            b2m = [b2_ref[i * 2 * dk + dk + j] for j in range(dk)]

            for c in range(n_chunks):                      # static unroll over 128-lane chunks
                off = c * 128
                a = out_ref[a0:a1, off:off + 128]          # (k, 128)   net-input half
                b = out_ref[b0:b1, off:off + 128]          # (dk, 128)  transformed half

                # fused first Linear (sig | mu): outer product + bias, then LeakyReLU
                h = b1_b
                for cc in range(n_in):
                    h = h + w1_b[cc] * a[cc:cc + 1, :]     # (2H,128) * sublane-bcast row
                h = jnp.maximum(h, LEAKY_SLOPE * h)        # LeakyReLU (slope in (0,1))
                hs = h[:H, :]                              # sig-net hidden (vreg-aligned split)
                hm = h[H:, :]                              # mu-net hidden

                # fused second Linear: fold the w2 multiply straight into the reductions
                sig_rows, mu_rows = [], []
                for j in range(dk):
                    sig_rows.append(jnp.sum(w2s_b[j] * hs, axis=0, keepdims=True) + b2s[j])
                    mu_rows.append(jnp.sum(w2m_b[j] * hm, axis=0, keepdims=True) + b2m[j])
                sig = sig_rows[0] if dk == 1 else jnp.concatenate(sig_rows, axis=0)  # (dk,128)
                mu = mu_rows[0] if dk == 1 else jnp.concatenate(mu_rows, axis=0)     # (dk,128)

                # affine coupling: only the transformed rows are rewritten (row-sliced store)
                out_ref[b0:b1, off:off + 128] = b * jnp.exp(sig) + mu

                # accumulate log|det J| in the last output row
                lj_inc = sig if dk == 1 else jnp.sum(sig, axis=0, keepdims=True)
                out_ref[d + 1:d + 2, off:off + 128] = (
                    out_ref[d + 1:d + 2, off:off + 128] + lj_inc)

        # epilogue: log_pz under N(0, I_d), chunked, direct row-sliced stores (no concat)
        for c in range(n_chunks):
            off = c * 128
            z = out_ref[0:d, off:off + 128]
            zsq = jnp.sum(z * z, axis=0, keepdims=True)
            out_ref[d:d + 1, off:off + 128] = log_norm_const - 0.5 * zsq

    return kernel


def stacked_nvp_forward(x, params, d, k, n_layers, flips, *, tile_b=1024):
    """params: stacked arrays w1s,b1s,w2s,b2s (sig net) and w1m,b1m,w2m,b2m (mu net)."""
    B = x.shape[0]
    assert x.shape[1] == d
    dk = d - k
    hidden = params["w1s"].shape[-1]
    if any(flips):
        assert k == dk, "flipped coupling layers require k == d - k (as in the PyTorch module)"
    assert tile_b % 128 == 0, "batch tile must be lane-dense (multiple of 128)"

    # ---- host-side weight packing: (n, 2H, k+1+dk) slab [W1^T | b1 | W2]  +  flat 2nd-layer biases ----
    w1p = jnp.concatenate([jnp.swapaxes(params["w1s"], 1, 2),
                           jnp.swapaxes(params["w1m"], 1, 2)], axis=1)        # (n, 2H, k)
    b1p = jnp.concatenate([params["b1s"], params["b1m"]], axis=1)[..., None]  # (n, 2H, 1)
    w2p = jnp.concatenate([params["w2s"], params["w2m"]], axis=1)             # (n, 2H, dk)
    wslab = jnp.concatenate([w1p, b1p, w2p], axis=2).astype(jnp.float32)      # (n, 2H, k+1+dk)
    # flat SMEM layout: idx = layer*2*dk + {0:sig,1:mu}*dk + j
    b2flat = jnp.stack([params["b2s"], params["b2m"]], axis=1).reshape(-1).astype(jnp.float32)

    # ---- lane-dense batch tiling; tile clamped to the padded batch so small B still works ----
    Bp128 = ((B + 127) // 128) * 128
    tile = min(tile_b, Bp128)
    Bp = ((B + tile - 1) // tile) * tile
    xT = jnp.transpose(x)                                  # native dtype; cast happens in-kernel
    if Bp != B:
        xT = jnp.pad(xT, ((0, 0), (0, Bp - B)))

    kernel = _make_kernel(d, k, hidden, n_layers, flips, tile)

    grid_spec = pltpu.PrefetchScalarGridSpec(
        num_scalar_prefetch=0,
        grid=(Bp // tile,),
        in_specs=[
            pl.BlockSpec((d, tile), lambda i: (0, i)),                        # x^T, batch on lanes
            pl.BlockSpec((n_layers, 2 * hidden, k + 1 + dk),
                         lambda i: (0, 0, 0)),                                # packed weights (VMEM)
            pl.BlockSpec(memory_space=pltpu.MemorySpace.SMEM),                # 2nd-layer biases (SMEM)
        ],
        out_specs=pl.BlockSpec((d + 2, tile), lambda i: (0, i)),              # z^T | log_pz | log_j
    )

    out = pl.pallas_call(
        kernel,
        out_shape=jax.ShapeDtypeStruct((d + 2, Bp), jnp.float32),
        grid_spec=grid_spec,
        compiler_params=pltpu.CompilerParams(
            dimension_semantics=("parallel",),
            vmem_limit_bytes=32 * 1024 * 1024),
    )(xT, wslab, b2flat)

    # NOTE: if the surrounding pipeline can consume the (d, B)-major layout directly,
    # the transpose/pad/slice passes here can be dropped entirely (review item 8).
    z = jnp.transpose(out[:d, :B]).astype(x.dtype)    # (B, d)
    log_pz = out[d, :B]                               # (B,)
    log_j = out[d + 1, :B]                            # (B,)
    return z, log_pz, log_j


# ---------------- pure-JAX reference (mirrors the PyTorch module) ----------------
def _mlp_ref(x1, w1, b1, w2, b2):
    h = x1 @ w1 + b1
    h = jnp.where(h > 0, h, LEAKY_SLOPE * h)
    return h @ w2 + b2


def stacked_nvp_reference(x, params, d, k, n_layers, flips):
    lj_total = jnp.zeros((x.shape[0],), jnp.float32)
    for i in range(n_layers):
        flip = flips[i]
        x1, x2 = x[:, :k], x[:, k:]
        if flip:
            x1, x2 = x2, x1
        sig = _mlp_ref(x1, params["w1s"][i], params["b1s"][i],
                       params["w2s"][i], params["b2s"][i])
        mu = _mlp_ref(x1, params["w1m"][i], params["b1m"][i],
                      params["w2m"][i], params["b2m"][i])
        z1, z2 = x1, x2 * jnp.exp(sig) + mu
        if flip:
            z1, z2 = z2, z1
        x = jnp.concatenate([z1, z2], axis=-1)
        lj_total = lj_total + jnp.sum(sig, axis=-1)
    log_pz = -0.5 * d * jnp.log(2.0 * jnp.pi) - 0.5 * jnp.sum(x * x, axis=-1)
    return x, log_pz, lj_total


# ---------------- deterministic parameter construction ----------------
def init_params(key, d, k, hidden, n_layers):
    dk = d - k
    keys = jax.random.split(key, 8)
    # PyTorch Linear default init: U(-1/sqrt(fan_in), 1/sqrt(fan_in))
    u = lambda kk, shape, fan: jax.random.uniform(
        kk, shape, jnp.float32, -1.0 / np.sqrt(fan), 1.0 / np.sqrt(fan))
    return {
        "w1s": u(keys[0], (n_layers, k, hidden), k),
        "b1s": u(keys[1], (n_layers, hidden), k),
        "w2s": u(keys[2], (n_layers, hidden, dk), hidden),
        "b2s": u(keys[3], (n_layers, dk), hidden),
        "w1m": u(keys[4], (n_layers, k, hidden), k),
        "b1m": u(keys[5], (n_layers, hidden), k),
        "w2m": u(keys[6], (n_layers, hidden, dk), hidden),
        "b2m": u(keys[7], (n_layers, dk), hidden),
    }


if __name__ == "__main__":
    # Shapes consistent with the notebook: d=2, k=1, hidden=32, n=4 stacked bijectors.
    # B=1000 (non-multiple of 128) exercises padding; tile_b=512 -> a 2-step lane-dense grid.
    d, k, hidden, n_layers = 2, 1, 32, 4
    flips = [bool(i % 2) for i in range(n_layers)]
    B = 1000

    key = jax.random.PRNGKey(0)
    key_x, key_p = jax.random.split(key)
    x = jax.random.normal(key_x, (B, d), jnp.float32)
    params = init_params(key_p, d, k, hidden, n_layers)

    fwd = jax.jit(functools.partial(stacked_nvp_forward, d=d, k=k,
                                    n_layers=n_layers, flips=flips, tile_b=512))
    z, log_pz, log_j = fwd(x, params)
    jax.block_until_ready((z, log_pz, log_j))

    # correctness check against a pure-JAX reference of the PyTorch semantics
    z_ref, log_pz_ref, log_j_ref = stacked_nvp_reference(
        x, params, d, k, n_layers, flips)
    np.testing.assert_allclose(np.asarray(z), np.asarray(z_ref), rtol=1e-4, atol=1e-4)
    np.testing.assert_allclose(np.asarray(log_pz), np.asarray(log_pz_ref), rtol=1e-4, atol=1e-4)
    np.testing.assert_allclose(np.asarray(log_j), np.asarray(log_j_ref), rtol=1e-4, atol=1e-4)

    # TODO(synk): stacked_NVP.inverse is not part of forward() and is not implemented here.
    print("KERNEL_OK")
</pallas_src>

<mosaic_0001>
module attributes {stable_mosaic.version = 11 : i64} {
  func.func @kernel(%arg0: i32, %arg1: memref<2x512xf32, #tpu.memory_space<vmem>>, %arg2: memref<4x64x3xf32, #tpu.memory_space<vmem>>, %arg3: memref<8xf32, #tpu.memory_space<smem>>, %arg4: memref<4x512xf32, #tpu.memory_space<vmem>>) attributes {dimension_semantics = [#tpu.dimension_semantics<parallel>], iteration_bounds = array<i64: 2>, scalar_prefetch = 0 : i64, scratch_operands = 0 : i64, tpu.core_type = #tpu.core_type<tc>, window_params = [{transform_indices = @transform_0, window_bounds = array<i64: 2, 512>}, {pipeline_mode = #tpu.pipeline_mode<synchronous>, transform_indices = @transform_1, window_bounds = array<i64: 4, 64, 3>}, {transform_indices = @transform_2, window_bounds = array<i64: 8>}, {transform_indices = @transform_3, window_bounds = array<i64: 4, 512>}]} {
    %c0 = arith.constant 0 : index
    %c0_0 = arith.constant 0 : index
    %0 = vector.load %arg1[%c0, %c0_0] : memref<2x512xf32, #tpu.memory_space<vmem>>, vector<2x512xf32>
    %c0_1 = arith.constant 0 : index
    %c0_2 = arith.constant 0 : index
    %1 = vector.load %arg4[%c0_1, %c0_2] : memref<4x512xf32, #tpu.memory_space<vmem>>, vector<2x512xf32>
    tpu.vector_store %arg4[%c0_1, %c0_2], %0 {strides = array<i32>} : memref<4x512xf32, #tpu.memory_space<vmem>>, vector<2x512xf32>,
    %cst = arith.constant 0.000000e+00 : f32
    %2 = vector.broadcast %cst : f32 to vector<1x512xf32>
    %c3 = arith.constant 3 : index
    %c0_3 = arith.constant 0 : index
    %3 = vector.load %arg4[%c3, %c0_3] : memref<4x512xf32, #tpu.memory_space<vmem>>, vector<1x512xf32>
    tpu.vector_store %arg4[%c3, %c0_3], %2 {strides = array<i32>} : memref<4x512xf32, #tpu.memory_space<vmem>>, vector<1x512xf32>,
    %c0_4 = arith.constant 0 : index
    %c0_5 = arith.constant 0 : index
    %c0_6 = arith.constant 0 : index
    %4 = vector.load %arg2[%c0_4, %c0_5, %c0_6] : memref<4x64x3xf32, #tpu.memory_space<vmem>>, vector<1x64x3xf32>
    %5 = vector.shape_cast %4 : vector<1x64x3xf32> to vector<64x3xf32>
    %6 = vector.extract_strided_slice %5 {offsets = [0, 1], sizes = [64, 1], strides = [1, 1]} : vector<64x3xf32> to vector<64x1xf32>
    %7 = vector.shape_cast %6 : vector<64x1xf32> to vector<64x1xf32>
    %8 = vector.broadcast %7 : vector<64x1xf32> to vector<64x128xf32>
    %9 = vector.extract_strided_slice %5 {offsets = [0, 0], sizes = [64, 1], strides = [1, 1]} : vector<64x3xf32> to vector<64x1xf32>
    %10 = vector.shape_cast %9 : vector<64x1xf32> to vector<64x1xf32>
    %11 = vector.broadcast %10 : vector<64x1xf32> to vector<64x128xf32>
    %12 = vector.extract_strided_slice %5 {offsets = [0, 2], sizes = [32, 1], strides = [1, 1]} : vector<64x3xf32> to vector<32x1xf32>
    %13 = vector.shape_cast %12 : vector<32x1xf32> to vector<32x1xf32>
    %14 = vector.broadcast %13 : vector<32x1xf32> to vector<32x128xf32>
    %15 = vector.extract_strided_slice %5 {offsets = [32, 2], sizes = [32, 1], strides = [1, 1]} : vector<64x3xf32> to vector<32x1xf32>
    %16 = vector.shape_cast %15 : vector<32x1xf32> to vector<32x1xf32>
    %17 = vector.broadcast %16 : vector<32x1xf32> to vector<32x128xf32>
    %c0_7 = arith.constant 0 : index
    %18 = memref.load %arg3[%c0_7] : memref<8xf32, #tpu.memory_space<smem>>
    %c1 = arith.constant 1 : index
    %19 = memref.load %arg3[%c1] : memref<8xf32, #tpu.memory_space<smem>>
    %c0_8 = arith.constant 0 : index
    %c0_9 = arith.constant 0 : index
    %20 = vector.load %arg4[%c0_8, %c0_9] : memref<4x512xf32, #tpu.memory_space<vmem>>, vector<1x128xf32>
    %c1_10 = arith.constant 1 : index
    %c0_11 = arith.constant 0 : index
    %21 = vector.load %arg4[%c1_10, %c0_11] : memref<4x512xf32, #tpu.memory_space<vmem>>, vector<1x128xf32>
    %22 = vector.broadcast %20 : vector<1x128xf32> to vector<64x128xf32>
    %23 = arith.mulf %11, %22 : vector<64x128xf32>
    %24 = arith.addf %8, %23 : vector<64x128xf32>
    %cst_12 = arith.constant 0.00999999977 : f32
    %25 = vector.broadcast %cst_12 : f32 to vector<64x128xf32>
    %26 = arith.mulf %25, %24 : vector<64x128xf32>
    %27 = arith.maximumf %24, %26 : vector<64x128xf32>
    %28 = vector.extract_strided_slice %27 {offsets = [0, 0], sizes = [32, 128], strides = [1, 1]} : vector<64x128xf32> to vector<32x128xf32>
    %29 = vector.extract_strided_slice %27 {offsets = [32, 0], sizes = [32, 128], strides = [1, 1]} : vector<64x128xf32> to vector<32x128xf32>
    %30 = arith.mulf %14, %28 : vector<32x128xf32>
    %cst_13 = arith.constant dense<0.000000e+00> : vector<128xf32>
    %31 = vector.multi_reduction <add>, %30, %cst_13 [0] : vector<32x128xf32> to vector<128xf32>
    %32 = vector.shape_cast %31 : vector<128xf32> to vector<1x128xf32>
    %33 = vector.broadcast %18 : f32 to vector<1x128xf32>
    %34 = arith.addf %32, %33 : vector<1x128xf32>
    %35 = arith.mulf %17, %29 : vector<32x128xf32>
    %cst_14 = arith.constant dense<0.000000e+00> : vector<128xf32>
    %36 = vector.multi_reduction <add>, %35, %cst_14 [0] : vector<32x128xf32> to vector<128xf32>
    %37 = vector.shape_cast %36 : vector<128xf32> to vector<1x128xf32>
    %38 = vector.broadcast %19 : f32 to vector<1x128xf32>
    %39 = arith.addf %37, %38 : vector<1x128xf32>
    %40 = math.exp %34 : vector<1x128xf32>
    %41 = arith.mulf %21, %40 : vector<1x128xf32>
    %42 = arith.addf %41, %39 : vector<1x128xf32>
    %c1_15 = arith.constant 1 : index
    %c0_16 = arith.constant 0 : index
    %43 = vector.load %arg4[%c1_15, %c0_16] : memref<4x512xf32, #tpu.memory_space<vmem>>, vector<1x128xf32>
    tpu.vector_store %arg4[%c1_15, %c0_16], %42 {strides = array<i32>} : memref<4x512xf32, #tpu.memory_space<vmem>>, vector<1x128xf32>,
    %c3_17 = arith.constant 3 : index
    %c0_18 = arith.constant 0 : index
    %44 = vector.load %arg4[%c3_17, %c0_18] : memref<4x512xf32, #tpu.memory_space<vmem>>, vector<1x128xf32>
    %45 = arith.addf %44, %34 : vector<1x128xf32>
    %c3_19 = arith.constant 3 : index
    %c0_20 = arith.constant 0 : index
    %46 = vector.load %arg4[%c3_19, %c0_20] : memref<4x512xf32, #tpu.memory_space<vmem>>, vector<1x128xf32>
    tpu.vector_store %arg4[%c3_19, %c0_20], %45 {strides = array<i32>} : memref<4x512xf32, #tpu.memory_space<vmem>>, vector<1x128xf32>,
    %c0_21 = arith.constant 0 : index
    %c128 = arith.constant 128 : index
    %47 = vector.load %arg4[%c0_21, %c128] : memref<4x512xf32, #tpu.memory_space<vmem>>, vector<1x128xf32>
    %c1_22 = arith.constant 1 : index
    %c128_23 = arith.constant 128 : index
    %48 = vector.load %arg4[%c1_22, %c128_23] : memref<4x512xf32, #tpu.memory_space<vmem>>, vector<1x128xf32>
    %49 = vector.broadcast %47 : vector<1x128xf32> to vector<64x128xf32>
    %50 = arith.mulf %11, %49 : vector<64x128xf32>
    %51 = arith.addf %8, %50 : vector<64x128xf32>
    %cst_24 = arith.constant 0.00999999977 : f32
    %52 = vector.broadcast %cst_24 : f32 to vector<64x128xf32>
    %53 = arith.mulf %52, %51 : vector<64x128xf32>
    %54 = arith.maximumf %51, %53 : vector<64x128xf32>
    %55 = vector.extract_strided_slice %54 {offsets = [0, 0], sizes = [32, 128], strides = [1, 1]} : vector<64x128xf32> to vector<32x128xf32>
    %56 = vector.extract_strided_slice %54 {offsets = [32, 0], sizes = [32, 128], strides = [1, 1]} : vector<64x128xf32> to vector<32x128xf32>
    %57 = arith.mulf %14, %55 : vector<32x128xf32>
    %cst_25 = arith.constant dense<0.000000e+00> : vector<128xf32>
    %58 = vector.multi_reduction <add>, %57, %cst_25 [0] : vector<32x128xf32> to vector<128xf32>
    %59 = vector.shape_cast %58 : vector<128xf32> to vector<1x128xf32>
    %60 = vector.broadcast %18 : f32 to vector<1x128xf32>
    %61 = arith.addf %59, %60 : vector<1x128xf32>
    %62 = arith.mulf %17, %56 : vector<32x128xf32>
    %cst_26 = arith.constant dense<0.000000e+00> : vector<128xf32>
    %63 = vector.multi_reduction <add>, %62, %cst_26 [0] : vector<32x128xf32> to vector<128xf32>
    %64 = vector.shape_cast %63 : vector<128xf32> to vector<1x128xf32>
    %65 = vector.broadcast %19 : f32 to vector<1x128xf32>
    %66 = arith.addf %64, %65 : vector<1x128xf32>
    %67 = math.exp %61 : vector<1x128xf32>
    %68 = arith.mulf %48, %67 : vector<1x128xf32>
    %69 = arith.addf %68, %66 : vector<1x128xf32>
    %c1_27 = arith.constant 1 : index
    %c128_28 = arith.constant 128 : index
    %70 = vector.load %arg4[%c1_27, %c128_28] : memref<4x512xf32, #tpu.memory_space<vmem>>, vector<1x128xf32>
    tpu.vector_store %arg4[%c1_27, %c128_28], %69 {strides = array<i32>} : memref<4x512xf32, #tpu.memory_space<vmem>>, vector<1x128xf32>,
    %c3_29 = arith.constant 3 : index
    %c128_30 = arith.constant 128 : index
    %71 = vector.load %arg4[%c3_29, %c128_30] : memref<4x512xf32, #tpu.memory_space<vmem>>, vector<1x128xf32>
    %72 = arith.addf %71, %61 : vector<1x128xf32>
    %c3_31 = arith.constant 3 : index
    %c128_32 = arith.constant 128 : index
    %73 = vector.load %arg4[%c3_31, %c128_32] : memref<4x512xf32, #tpu.memory_space<vmem>>, vector<1x128xf32>
    tpu.vector_store %arg4[%c3_31, %c128_32], %72 {strides = array<i32>} : memref<4x512xf32, #tpu.memory_space<vmem>>, vector<1x128xf32>,
    %c0_33 = arith.constant 0 : index
    %c256 = arith.constant 256 : index
    %74 = vector.load %arg4[%c0_33, %c256] : memref<4x512xf32, #tpu.memory_space<vmem>>, vector<1x128xf32>
    %c1_34 = arith.constant 1 : index
    %c256_35 = arith.constant 256 : index
    %75 = vector.load %arg4[%c1_34, %c256_35] : memref<4x512xf32, #tpu.memory_space<vmem>>, vector<1x128xf32>
    %76 = vector.broadcast %74 : vector<1x128xf32> to vector<64x128xf32>
    %77 = arith.mulf %11, %76 : vector<64x128xf32>
    %78 = arith.addf %8, %77 : vector<64x128xf32>
    %cst_36 = arith.constant 0.00999999977 : f32
    %79 = vector.broadcast %cst_36 : f32 to vector<64x128xf32>
    %80 = arith.mulf %79, %78 : vector<64x128xf32>
    %81 = arith.maximumf %78, %80 : vector<64x128xf32>
    %82 = vector.extract_strided_slice %81 {offsets = [0, 0], sizes = [32, 128], strides = [1, 1]} : vector<64x128xf32> to vector<32x128xf32>
    %83 = vector.extract_strided_slice %81 {offsets = [32, 0], sizes = [32, 128], strides = [1, 1]} : vector<64x128xf32> to vector<32x128xf32>
    %84 = arith.mulf %14, %82 : vector<32x128xf32>
    %cst_37 = arith.constant dense<0.000000e+00> : vector<128xf32>
    %85 = vector.multi_reduction <add>, %84, %cst_37 [0] : vector<32x128xf32> to vector<128xf32>
    %86 = vector.shape_cast %85 : vector<128xf32> to vector<1x128xf32>
    %87 = vector.broadcast %18 : f32 to vector<1x128xf32>
    %88 = arith.addf %86, %87 : vector<1x128xf32>
    %89 = arith.mulf %17, %83 : vector<32x128xf32>
    %cst_38 = arith.constant dense<0.000000e+00> : vector<128xf32>
    %90 = vector.multi_reduction <add>, %89, %cst_38 [0] : vector<32x128xf32> to vector<128xf32>
    %91 = vector.shape_cast %90 : vector<128xf32> to vector<1x128xf32>
    %92 = vector.broadcast %19 : f32 to vector<1x128xf32>
    %93 = arith.addf %91, %92 : vector<1x128xf32>
    %94 = math.exp %88 : vector<1x128xf32>
    %95 = arith.mulf %75, %94 : vector<1x128xf32>
    %96 = arith.addf %95, %93 : vector<1x128xf32>
    %c1_39 = arith.constant 1 : index
    %c256_40 = arith.constant 256 : index
    %97 = vector.load %arg4[%c1_39, %c256_40] : memref<4x512xf32, #tpu.memory_space<vmem>>, vector<1x128xf32>
    tpu.vector_store %arg4[%c1_39, %c256_40], %96 {strides = array<i32>} : memref<4x512xf32, #tpu.memory_space<vmem>>, vector<1x128xf32>,
    %c3_41 = arith.constant 3 : index
    %c256_42 = arith.constant 256 : index
    %98 = vector.load %arg4[%c3_41, %c256_42] : memref<4x512xf32, #tpu.memory_space<vmem>>, vector<1x128xf32>
    %99 = arith.addf %98, %88 : vector<1x128xf32>
    %c3_43 = arith.constant 3 : index
    %c256_44 = arith.constant 256 : index
    %100 = vector.load %arg4[%c3_43, %c256_44] : memref<4x512xf32, #tpu.memory_space<vmem>>, vector<1x128xf32>
    tpu.vector_store %arg4[%c3_43, %c256_44], %99 {strides = array<i32>} : memref<4x512xf32, #tpu.memory_space<vmem>>, vector<1x128xf32>,
    %c0_45 = arith.constant 0 : index
    %c384 = arith.constant 384 : index
    %101 = vector.load %arg4[%c0_45, %c384] : memref<4x512xf32, #tpu.memory_space<vmem>>, vector<1x128xf32>
    %c1_46 = arith.constant 1 : index
    %c384_47 = arith.constant 384 : index
    %102 = vector.load %arg4[%c1_46, %c384_47] : memref<4x512xf32, #tpu.memory_space<vmem>>, vector<1x128xf32>
    %103 = vector.broadcast %101 : vector<1x128xf32> to vector<64x128xf32>
    %104 = arith.mulf %11, %103 : vector<64x128xf32>
    %105 = arith.addf %8, %104 : vector<64x128xf32>
    %cst_48 = arith.constant 0.00999999977 : f32
    %106 = vector.broadcast %cst_48 : f32 to vector<64x128xf32>
    %107 = arith.mulf %106, %105 : vector<64x128xf32>
    %108 = arith.maximumf %105, %107 : vector<64x128xf32>
    %109 = vector.extract_strided_slice %108 {offsets = [0, 0], sizes = [32, 128], strides = [1, 1]} : vector<64x128xf32> to vector<32x128xf32>
    %110 = vector.extract_strided_slice %108 {offsets = [32, 0], sizes = [32, 128], strides = [1, 1]} : vector<64x128xf32> to vector<32x128xf32>
    %111 = arith.mulf %14, %109 : vector<32x128xf32>
    %cst_49 = arith.constant dense<0.000000e+00> : vector<128xf32>
    %112 = vector.multi_reduction <add>, %111, %cst_49 [0] : vector<32x128xf32> to vector<128xf32>
    %113 = vector.shape_cast %112 : vector<128xf32> to vector<1x128xf32>
    %114 = vector.broadcast %18 : f32 to vector<1x128xf32>
    %115 = arith.addf %113, %114 : vector<1x128xf32>
    %116 = arith.mulf %17, %110 : vector<32x128xf32>
    %cst_50 = arith.constant dense<0.000000e+00> : vector<128xf32>
    %117 = vector.multi_reduction <add>, %116, %cst_50 [0] : vector<32x128xf32> to vector<128xf32>
    %118 = vector.shape_cast %117 : vector<128xf32> to vector<1x128xf32>
    %119 = vector.broadcast %19 : f32 to vector<1x128xf32>
    %120 = arith.addf %118, %119 : vector<1x128xf32>
    %121 = math.exp %115 : vector<1x128xf32>
    %122 = arith.mulf %102, %121 : vector<1x128xf32>
    %123 = arith.addf %122, %120 : vector<1x128xf32>
    %c1_51 = arith.constant 1 : index
    %c384_52 = arith.constant 384 : index
    %124 = vector.load %arg4[%c1_51, %c384_52] : memref<4x512xf32, #tpu.memory_space<vmem>>, vector<1x128xf32>
    tpu.vector_store %arg4[%c1_51, %c384_52], %123 {strides = array<i32>} : memref<4x512xf32, #tpu.memory_space<vmem>>, vector<1x128xf32>,
    %c3_53 = arith.constant 3 : index
    %c384_54 = arith.constant 384 : index
    %125 = vector.load %arg4[%c3_53, %c384_54] : memref<4x512xf32, #tpu.memory_space<vmem>>, vector<1x128xf32>
    %126 = arith.addf %125, %115 : vector<1x128xf32>
    %c3_55 = arith.constant 3 : index
    %c384_56 = arith.constant 384 : index
    %127 = vector.load %arg4[%c3_55, %c384_56] : memref<4x512xf32, #tpu.memory_space<vmem>>, vector<1x128xf32>
    tpu.vector_store %arg4[%c3_55, %c384_56], %126 {strides = array<i32>} : memref<4x512xf32, #tpu.memory_space<vmem>>, vector<1x128xf32>,
    %c1_57 = arith.constant 1 : index
    %c0_58 = arith.constant 0 : index
    %c0_59 = arith.constant 0 : index
    %128 = vector.load %arg2[%c1_57, %c0_58, %c0_59] : memref<4x64x3xf32, #tpu.memory_space<vmem>>, vector<1x64x3xf32>
    %129 = vector.shape_cast %128 : vector<1x64x3xf32> to vector<64x3xf32>
    %130 = vector.extract_strided_slice %129 {offsets = [0, 1], sizes = [64, 1], strides = [1, 1]} : vector<64x3xf32> to vector<64x1xf32>
    %131 = vector.shape_cast %130 : vector<64x1xf32> to vector<64x1xf32>
    %132 = vector.broadcast %131 : vector<64x1xf32> to vector<64x128xf32>
    %133 = vector.extract_strided_slice %129 {offsets = [0, 0], sizes = [64, 1], strides = [1, 1]} : vector<64x3xf32> to vector<64x1xf32>
    %134 = vector.shape_cast %133 : vector<64x1xf32> to vector<64x1xf32>
    %135 = vector.broadcast %134 : vector<64x1xf32> to vector<64x128xf32>
    %136 = vector.extract_strided_slice %129 {offsets = [0, 2], sizes = [32, 1], strides = [1, 1]} : vector<64x3xf32> to vector<32x1xf32>
    %137 = vector.shape_cast %136 : vector<32x1xf32> to vector<32x1xf32>
    %138 = vector.broadcast %137 : vector<32x1xf32> to vector<32x128xf32>
    %139 = vector.extract_strided_slice %129 {offsets = [32, 2], sizes = [32, 1], strides = [1, 1]} : vector<64x3xf32> to vector<32x1xf32>
    %140 = vector.shape_cast %139 : vector<32x1xf32> to vector<32x1xf32>
    %141 = vector.broadcast %140 : vector<32x1xf32> to vector<32x128xf32>
    %c2 = arith.constant 2 : index
    %142 = memref.load %arg3[%c2] : memref<8xf32, #tpu.memory_space<smem>>
    %c3_60 = arith.constant 3 : index
    %143 = memref.load %arg3[%c3_60] : memref<8xf32, #tpu.memory_space<smem>>
    %c1_61 = arith.constant 1 : index
    %c0_62 = arith.constant 0 : index
    %144 = vector.load %arg4[%c1_61, %c0_62] : memref<4x512xf32, #tpu.memory_space<vmem>>, vector<1x128xf32>
    %c0_63 = arith.constant 0 : index
    %c0_64 = arith.constant 0 : index
    %145 = vector.load %arg4[%c0_63, %c0_64] : memref<4x512xf32, #tpu.memory_space<vmem>>, vector<1x128xf32>
    %146 = vector.broadcast %144 : vector<1x128xf32> to vector<64x128xf32>
    %147 = arith.mulf %135, %146 : vector<64x128xf32>
    %148 = arith.addf %132, %147 : vector<64x128xf32>
    %cst_65 = arith.constant 0.00999999977 : f32
    %149 = vector.broadcast %cst_65 : f32 to vector<64x128xf32>
    %150 = arith.mulf %149, %148 : vector<64x128xf32>
    %151 = arith.maximumf %148, %150 : vector<64x128xf32>
    %152 = vector.extract_strided_slice %151 {offsets = [0, 0], sizes = [32, 128], strides = [1, 1]} : vector<64x128xf32> to vector<32x128xf32>
    %153 = vector.extract_strided_slice %151 {offsets = [32, 0], sizes = [32, 128], strides = [1, 1]} : vector<64x128xf32> to vector<32x128xf32>
    %154 = arith.mulf %138, %152 : vector<32x128xf32>
    %cst_66 = arith.constant dense<0.000000e+00> : vector<128xf32>
    %155 = vector.multi_reduction <add>, %154, %cst_66 [0] : vector<32x128xf32> to vector<128xf32>
    %156 = vector.shape_cast %155 : vector<128xf32> to vector<1x128xf32>
    %157 = vector.broadcast %142 : f32 to vector<1x128xf32>
    %158 = arith.addf %156, %157 : vector<1x128xf32>
    %159 = arith.mulf %141, %153 : vector<32x128xf32>
    %cst_67 = arith.constant dense<0.000000e+00> : vector<128xf32>
    %160 = vector.multi_reduction <add>, %159, %cst_67 [0] : vector<32x128xf32> to vector<128xf32>
    %161 = vector.shape_cast %160 : vector<128xf32> to vector<1x128xf32>
    %162 = vector.broadcast %143 : f32 to vector<1x128xf32>
    %163 = arith.addf %161, %162 : vector<1x128xf32>
    %164 = math.exp %158 : vector<1x128xf32>
    %165 = arith.mulf %145, %164 : vector<1x128xf32>
    %166 = arith.addf %165, %163 : vector<1x128xf32>
    %c0_68 = arith.constant 0 : index
    %c0_69 = arith.constant 0 : index
    %167 = vector.load %arg4[%c0_68, %c0_69] : memref<4x512xf32, #tpu.memory_space<vmem>>, vector<1x128xf32>
    tpu.vector_store %arg4[%c0_68, %c0_69], %166 {strides = array<i32>} : memref<4x512xf32, #tpu.memory_space<vmem>>, vector<1x128xf32>,
    %c3_70 = arith.constant 3 : index
    %c0_71 = arith.constant 0 : index
    %168 = vector.load %arg4[%c3_70, %c0_71] : memref<4x512xf32, #tpu.memory_space<vmem>>, vector<1x128xf32>
    %169 = arith.addf %168, %158 : vector<1x128xf32>
    %c3_72 = arith.constant 3 : index
    %c0_73 = arith.constant 0 : index
    %170 = vector.load %arg4[%c3_72, %c0_73] : memref<4x512xf32, #tpu.memory_space<vmem>>, vector<1x128xf32>
    tpu.vector_store %arg4[%c3_72, %c0_73], %169 {strides = array<i32>} : memref<4x512xf32, #tpu.memory_space<vmem>>, vector<1x128xf32>,
    %c1_74 = arith.constant 1 : index
    %c128_75 = arith.constant 128 : index
    %171 = vector.load %arg4[%c1_74, %c128_75] : memref<4x512xf32, #tpu.memory_space<vmem>>, vector<1x128xf32>
    %c0_76 = arith.constant 0 : index
    %c128_77 = arith.constant 128 : index
    %172 = vector.load %arg4[%c0_76, %c128_77] : memref<4x512xf32, #tpu.memory_space<vmem>>, vector<1x128xf32>
    %173 = vector.broadcast %171 : vector<1x128xf32> to vector<64x128xf32>
    %174 = arith.mulf %135, %173 : vector<64x128xf32>
    %175 = arith.addf %132, %174 : vector<64x128xf32>
    %cst_78 = arith.constant 0.00999999977 : f32
    %176 = vector.broadcast %cst_78 : f32 to vector<64x128xf32>
    %177 = arith.mulf %176, %175 : vector<64x128xf32>
    %178 = arith.maximumf %175, %177 : vector<64x128xf32>
    %179 = vector.extract_strided_slice %178 {offsets = [0, 0], sizes = [32, 128], strides = [1, 1]} : vector<64x128xf32> to vector<32x128xf32>
    %180 = vector.extract_strided_slice %178 {offsets = [32, 0], sizes = [32, 128], strides = [1, 1]} : vector<64x128xf32> to vector<32x128xf32>
    %181 = arith.mulf %138, %179 : vector<32x128xf32>
    %cst_79 = arith.constant dense<0.000000e+00> : vector<128xf32>
    %182 = vector.multi_reduction <add>, %181, %cst_79 [0] : vector<32x128xf32> to vector<128xf32>
    %183 = vector.shape_cast %182 : vector<128xf32> to vector<1x128xf32>
    %184 = vector.broadcast %142 : f32 to vector<1x128xf32>
    %185 = arith.addf %183, %184 : vector<1x128xf32>
    %186 = arith.mulf %141, %180 : vector<32x128xf32>
    %cst_80 = arith.constant dense<0.000000e+00> : vector<128xf32>
    %187 = vector.multi_reduction <add>, %186, %cst_80 [0] : vector<32x128xf32> to vector<128xf32>
    %188 = vector.shape_cast %187 : vector<128xf32> to vector<1x128xf32>
    %189 = vector.broadcast %143 : f32 to vector<1x128xf32>
    %190 = arith.addf %188, %189 : vector<1x128xf32>
    %191 = math.exp %185 : vector<1x128xf32>
    %192 = arith.mulf %172, %191 : vector<1x128xf32>
    %193 = arith.addf %192, %190 : vector<1x128xf32>
    %c0_81 = arith.constant 0 : index
    %c128_82 = arith.constant 128 : index
    %194 = vector.load %arg4[%c0_81, %c128_82] : memref<4x512xf32, #tpu.memory_space<vmem>>, vector<1x128xf32>
    tpu.vector_store %arg4[%c0_81, %c128_82], %193 {strides = array<i32>} : memref<4x512xf32, #tpu.memory_space<vmem>>, vector<1x128xf32>,
    %c3_83 = arith.constant 3 : index
    %c128_84 = arith.constant 128 : index
    %195 = vector.load %arg4[%c3_83, %c128_84] : memref<4x512xf32, #tpu.memory_space<vmem>>, vector<1x128xf32>
    %196 = arith.addf %195, %185 : vector<1x128xf32>
    %c3_85 = arith.constant 3 : index
    %c128_86 = arith.constant 128 : index
    %197 = vector.load %arg4[%c3_85, %c128_86] : memref<4x512xf32, #tpu.memory_space<vmem>>, vector<1x128xf32>
    tpu.vector_store %arg4[%c3_85, %c128_86], %196 {strides = array<i32>} : memref<4x512xf32, #tpu.memory_space<vmem>>, vector<1x128xf32>,
    %c1_87 = arith.constant 1 : index
    %c256_88 = arith.constant 256 : index
    %198 = vector.load %arg4[%c1_87, %c256_88] : memref<4x512xf32, #tpu.memory_space<vmem>>, vector<1x128xf32>
    %c0_89 = arith.constant 0 : index
    %c256_90 = arith.constant 256 : index
    %199 = vector.load %arg4[%c0_89, %c256_90] : memref<4x512xf32, #tpu.memory_space<vmem>>, vector<1x128xf32>
    %200 = vector.broadcast %198 : vector<1x128xf32> to vector<64x128xf32>
    %201 = arith.mulf %135, %200 : vector<64x128xf32>
    %202 = arith.addf %132, %201 : vector<64x128xf32>
    %cst_91 = arith.constant 0.00999999977 : f32
    %203 = vector.broadcast %cst_91 : f32 to vector<64x128xf32>
    %204 = arith.mulf %203, %202 : vector<64x128xf32>
    %205 = arith.maximumf %202, %204 : vector<64x128xf32>
    %206 = vector.extract_strided_slice %205 {offsets = [0, 0], sizes = [32, 128], strides = [1, 1]} : vector<64x128xf32> to vector<32x128xf32>
    %207 = vector.extract_strided_slice %205 {offsets = [32, 0], sizes = [32, 128], strides = [1, 1]} : vector<64x128xf32> to vector<32x128xf32>
    %208 = arith.mulf %138, %206 : vector<32x128xf32>
    %cst_92 = arith.constant dense<0.000000e+00> : vector<128xf32>
    %209 = vector.multi_reduction <add>, %208, %cst_92 [0] : vector<32x128xf32> to vector<128xf32>
    %210 = vector.shape_cast %209 : vector<128xf32> to vector<1x128xf32>
    %211 = vector.broadcast %142 : f32 to vector<1x128xf32>
    %212 = arith.addf %210, %211 : vector<1x128xf32>
    %213 = arith.mulf %141, %207 : vector<32x128xf32>
    %cst_93 = arith.constant dense<0.000000e+00> : vector<128xf32>
    %214 = vector.multi_reduction <add>, %213, %cst_93 [0] : vector<32x128xf32> to vector<128xf32>
    %215 = vector.shape_cast %214 : vector<128xf32> to vector<1x128xf32>
    %216 = vector.broadcast %143 : f32 to vector<1x128xf32>
    %217 = arith.addf %215, %216 : vector<1x128xf32>
    %218 = math.exp %212 : vector<1x128xf32>
    %219 = arith.mulf %199, %218 : vector<1x128xf32>
    %220 = arith.addf %219, %217 : vector<1x128xf32>
    %c0_94 = arith.constant 0 : index
    %c256_95 = arith.constant 256 : index
    %221 = vector.load %arg4[%c0_94, %c256_95] : memref<4x512xf32, #tpu.memory_space<vmem>>, vector<1x128xf32>
    tpu.vector_store %arg4[%c0_94, %c256_95], %220 {strides = array<i32>} : memref<4x512xf32, #tpu.memory_space<vmem>>, vector<1x128xf32>,
    %c3_96 = arith.constant 3 : index
    %c256_97 = arith.constant 256 : index
    %222 = vector.load %arg4[%c3_96, %c256_97] : memref<4x512xf32, #tpu.memory_space<vmem>>, vector<1x128xf32>
    %223 = arith.addf %222, %212 : vector<1x128xf32>
    %c3_98 = arith.constant 3 : index
    %c256_99 = arith.constant 256 : index
    %224 = vector.load %arg4[%c3_98, %c256_99] : memref<4x512xf32, #tpu.memory_space<vmem>>, vector<1x128xf32>
    tpu.vector_store %arg4[%c3_98, %c256_99], %223 {strides = array<i32>} : memref<4x512xf32, #tpu.memory_space<vmem>>, vector<1x128xf32>,
    %c1_100 = arith.constant 1 : index
    %c384_101 = arith.constant 384 : index
    %225 = vector.load %arg4[%c1_100, %c384_101] : memref<4x512xf32, #tpu.memory_space<vmem>>, vector<1x128xf32>
    %c0_102 = arith.constant 0 : index
    %c384_103 = arith.constant 384 : index
    %226 = vector.load %arg4[%c0_102, %c384_103] : memref<4x512xf32, #tpu.memory_space<vmem>>, vector<1x128xf32>
    %227 = vector.broadcast %225 : vector<1x128xf32> to vector<64x128xf32>
    %228 = arith.mulf %135, %227 : vector<64x128xf32>
    %229 = arith.addf %132, %228 : vector<64x128xf32>
    %cst_104 = arith.constant 0.00999999977 : f32
    %230 = vector.broadcast %cst_104 : f32 to vector<64x128xf32>
    %231 = arith.mulf %230, %229 : vector<64x128xf32>
    %232 = arith.maximumf %229, %231 : vector<64x128xf32>
    %233 = vector.extract_strided_slice %232 {offsets = [0, 0], sizes = [32, 128], strides = [1, 1]} : vector<64x128xf32> to vector<32x128xf32>
    %234 = vector.extract_strided_slice %232 {offsets = [32, 0], sizes = [32, 128], strides = [1, 1]} : vector<64x128xf32> to vector<32x128xf32>
    %235 = arith.mulf %138, %233 : vector<32x128xf32>
    %cst_105 = arith.constant dense<0.000000e+00> : vector<128xf32>
    %236 = vector.multi_reduction <add>, %235, %cst_105 [0] : vector<32x128xf32> to vector<128xf32>
    %237 = vector.shape_cast %236 : vector<128xf32> to vector<1x128xf32>
    %238 = vector.broadcast %142 : f32 to vector<1x128xf32>
    %239 = arith.addf %237, %238 : vector<1x128xf32>
    %240 = arith.mulf %141, %234 : vector<32x128xf32>
    %cst_106 = arith.constant dense<0.000000e+00> : vector<128xf32>
    %241 = vector.multi_reduction <add>, %240, %cst_106 [0] : vector<32x128xf32> to vector<128xf32>
    %242 = vector.shape_cast %241 : vector<128xf32> to vector<1x128xf32>
    %243 = vector.broadcast %143 : f32 to vector<1x128xf32>
    %244 = arith.addf %242, %243 : vector<1x128xf32>
    %245 = math.exp %239 : vector<1x128xf32>
    %246 = arith.mulf %226, %245 : vector<1x128xf32>
    %247 = arith.addf %246, %244 : vector<1x128xf32>
    %c0_107 = arith.constant 0 : index
    %c384_108 = arith.constant 384 : index
    %248 = vector.load %arg4[%c0_107, %c384_108] : memref<4x512xf32, #tpu.memory_space<vmem>>, vector<1x128xf32>
    tpu.vector_store %arg4[%c0_107, %c384_108], %247 {strides = array<i32>} : memref<4x512xf32, #tpu.memory_space<vmem>>, vector<1x128xf32>,
    %c3_109 = arith.constant 3 : index
    %c384_110 = arith.constant 384 : index
    %249 = vector.load %arg4[%c3_109, %c384_110] : memref<4x512xf32, #tpu.memory_space<vmem>>, vector<1x128xf32>
    %250 = arith.addf %249, %239 : vector<1x128xf32>
    %c3_111 = arith.constant 3 : index
    %c384_112 = arith.constant 384 : index
    %251 = vector.load %arg4[%c3_111, %c384_112] : memref<4x512xf32, #tpu.memory_space<vmem>>, vector<1x128xf32>
    tpu.vector_store %arg4[%c3_111, %c384_112], %250 {strides = array<i32>} : memref<4x512xf32, #tpu.memory_space<vmem>>, vector<1x128xf32>,
    %c2_113 = arith.constant 2 : index
    %c0_114 = arith.constant 0 : index
    %c0_115 = arith.constant 0 : index
    %252 = vector.load %arg2[%c2_113, %c0_114, %c0_115] : memref<4x64x3xf32, #tpu.memory_space<vmem>>, vector<1x64x3xf32>
    %253 = vector.shape_cast %252 : vector<1x64x3xf32> to vector<64x3xf32>
    %254 = vector.extract_strided_slice %253 {offsets = [0, 1], sizes = [64, 1], strides = [1, 1]} : vector<64x3xf32> to vector<64x1xf32>
    %255 = vector.shape_cast %254 : vector<64x1xf32> to vector<64x1xf32>
    %256 = vector.broadcast %255 : vector<64x1xf32> to vector<64x128xf32>
    %257 = vector.extract_strided_slice %253 {offsets = [0, 0], sizes = [64, 1], strides = [1, 1]} : vector<64x3xf32> to vector<64x1xf32>
    %258 = vector.shape_cast %257 : vector<64x1xf32> to vector<64x1xf32>
    %259 = vector.broadcast %258 : vector<64x1xf32> to vector<64x128xf32>
    %260 = vector.extract_strided_slice %253 {offsets = [0, 2], sizes = [32, 1], strides = [1, 1]} : vector<64x3xf32> to vector<32x1xf32>
    %261 = vector.shape_cast %260 : vector<32x1xf32> to vector<32x1xf32>
    %262 = vector.broadcast %261 : vector<32x1xf32> to vector<32x128xf32>
    %263 = vector.extract_strided_slice %253 {offsets = [32, 2], sizes = [32, 1], strides = [1, 1]} : vector<64x3xf32> to vector<32x1xf32>
    %264 = vector.shape_cast %263 : vector<32x1xf32> to vector<32x1xf32>
    %265 = vector.broadcast %264 : vector<32x1xf32> to vector<32x128xf32>
    %c4 = arith.constant 4 : index
    %266 = memref.load %arg3[%c4] : memref<8xf32, #tpu.memory_space<smem>>
    %c5 = arith.constant 5 : index
    %267 = memref.load %arg3[%c5] : memref<8xf32, #tpu.memory_space<smem>>
    %c0_116 = arith.constant 0 : index
    %c0_117 = arith.constant 0 : index
    %268 = vector.load %arg4[%c0_116, %c0_117] : memref<4x512xf32, #tpu.memory_space<vmem>>, vector<1x128xf32>
    %c1_118 = arith.constant 1 : index
    %c0_119 = arith.constant 0 : index
    %269 = vector.load %arg4[%c1_118, %c0_119] : memref<4x512xf32, #tpu.memory_space<vmem>>, vector<1x128xf32>
    %270 = vector.broadcast %268 : vector<1x128xf32> to vector<64x128xf32>
    %271 = arith.mulf %259, %270 : vector<64x128xf32>
    %272 = arith.addf %256, %271 : vector<64x128xf32>
    %cst_120 = arith.constant 0.00999999977 : f32
    %273 = vector.broadcast %cst_120 : f32 to vector<64x128xf32>
    %274 = arith.mulf %273, %272 : vector<64x128xf32>
    %275 = arith.maximumf %272, %274 : vector<64x128xf32>
    %276 = vector.extract_strided_slice %275 {offsets = [0, 0], sizes = [32, 128], strides = [1, 1]} : vector<64x128xf32> to vector<32x128xf32>
    %277 = vector.extract_strided_slice %275 {offsets = [32, 0], sizes = [32, 128], strides = [1, 1]} : vector<64x128xf32> to vector<32x128xf32>
    %278 = arith.mulf %262, %276 : vector<32x128xf32>
    %cst_121 = arith.constant dense<0.000000e+00> : vector<128xf32>
    %279 = vector.multi_reduction <add>, %278, %cst_121 [0] : vector<32x128xf32> to vector<128xf32>
    %280 = vector.shape_cast %279 : vector<128xf32> to vector<1x128xf32>
    %281 = vector.broadcast %266 : f32 to vector<1x128xf32>
    %282 = arith.addf %280, %281 : vector<1x128xf32>
    %283 = arith.mulf %265, %277 : vector<32x128xf32>
    %cst_122 = arith.constant dense<0.000000e+00> : vector<128xf32>
    %284 = vector.multi_reduction <add>, %283, %cst_122 [0] : vector<32x128xf32> to vector<128xf32>
    %285 = vector.shape_cast %284 : vector<128xf32> to vector<1x128xf32>
    %286 = vector.broadcast %267 : f32 to vector<1x128xf32>
    %287 = arith.addf %285, %286 : vector<1x128xf32>
    %288 = math.exp %282 : vector<1x128xf32>
    %289 = arith.mulf %269, %288 : vector<1x128xf32>
    %290 = arith.addf %289, %287 : vector<1x128xf32>
    %c1_123 = arith.constant 1 : index
    %c0_124 = arith.constant 0 : index
    %291 = vector.load %arg4[%c1_123, %c0_124] : memref<4x512xf32, #tpu.memory_space<vmem>>, vector<1x128xf32>
    tpu.vector_store %arg4[%c1_123, %c0_124], %290 {strides = array<i32>} : memref<4x512xf32, #tpu.memory_space<vmem>>, vector<1x128xf32>,
    %c3_125 = arith.constant 3 : index
    %c0_126 = arith.constant 0 : index
    %292 = vector.load %arg4[%c3_125, %c0_126] : memref<4x512xf32, #tpu.memory_space<vmem>>, vector<1x128xf32>
    %293 = arith.addf %292, %282 : vector<1x128xf32>
    %c3_127 = arith.constant 3 : index
    %c0_128 = arith.constant 0 : index
    %294 = vector.load %arg4[%c3_127, %c0_128] : memref<4x512xf32, #tpu.memory_space<vmem>>, vector<1x128xf32>
    tpu.vector_store %arg4[%c3_127, %c0_128], %293 {strides = array<i32>} : memref<4x512xf32, #tpu.memory_space<vmem>>, vector<1x128xf32>,
    %c0_129 = arith.constant 0 : index
    %c128_130 = arith.constant 128 : index
    %295 = vector.load %arg4[%c0_129, %c128_130] : memref<4x512xf32, #tpu.memory_space<vmem>>, vector<1x128xf32>
    %c1_131 = arith.constant 1 : index
    %c128_132 = arith.constant 128 : index
    %296 = vector.load %arg4[%c1_131, %c128_132] : memref<4x512xf32, #tpu.memory_space<vmem>>, vector<1x128xf32>
    %297 = vector.broadcast %295 : vector<1x128xf32> to vector<64x128xf32>
    %298 = arith.mulf %259, %297 : vector<64x128xf32>
    %299 = arith.addf %256, %298 : vector<64x128xf32>
    %cst_133 = arith.constant 0.00999999977 : f32
    %300 = vector.broadcast %cst_133 : f32 to vector<64x128xf32>
    %301 = arith.mulf %300, %299 : vector<64x128xf32>
    %302 = arith.maximumf %299, %301 : vector<64x128xf32>
    %303 = vector.extract_strided_slice %302 {offsets = [0, 0], sizes = [32, 128], strides = [1, 1]} : vector<64x128xf32> to vector<32x128xf32>
    %304 = vector.extract_strided_slice %302 {offsets = [32, 0], sizes = [32, 128], strides = [1, 1]} : vector<64x128xf32> to vector<32x128xf32>
    %305 = arith.mulf %262, %303 : vector<32x128xf32>
    %cst_134 = arith.constant dense<0.000000e+00> : vector<128xf32>
    %306 = vector.multi_reduction <add>, %305, %cst_134 [0] : vector<32x128xf32> to vector<128xf32>
    %307 = vector.shape_cast %306 : vector<128xf32> to vector<1x128xf32>
    %308 = vector.broadcast %266 : f32 to vector<1x128xf32>
    %309 = arith.addf %307, %308 : vector<1x128xf32>
    %310 = arith.mulf %265, %304 : vector<32x128xf32>
    %cst_135 = arith.constant dense<0.000000e+00> : vector<128xf32>
    %311 = vector.multi_reduction <add>, %310, %cst_135 [0] : vector<32x128xf32> to vector<128xf32>
    %312 = vector.shape_cast %311 : vector<128xf32> to vector<1x128xf32>
    %313 = vector.broadcast %267 : f32 to vector<1x128xf32>
    %314 = arith.addf %312, %313 : vector<1x128xf32>
    %315 = math.exp %309 : vector<1x128xf32>
    %316 = arith.mulf %296, %315 : vector<1x128xf32>
    %317 = arith.addf %316, %314 : vector<1x128xf32>
    %c1_136 = arith.constant 1 : index
    %c128_137 = arith.constant 128 : index
    %318 = vector.load %arg4[%c1_136, %c128_137] : memref<4x512xf32, #tpu.memory_space<vmem>>, vector<1x128xf32>
    tpu.vector_store %arg4[%c1_136, %c128_137], %317 {strides = array<i32>} : memref<4x512xf32, #tpu.memory_space<vmem>>, vector<1x128xf32>,
    %c3_138 = arith.constant 3 : index
    %c128_139 = arith.constant 128 : index
    %319 = vector.load %arg4[%c3_138, %c128_139] : memref<4x512xf32, #tpu.memory_space<vmem>>, vector<1x128xf32>
    %320 = arith.addf %319, %309 : vector<1x128xf32>
    %c3_140 = arith.constant 3 : index
    %c128_141 = arith.constant 128 : index
    %321 = vector.load %arg4[%c3_140, %c128_141] : memref<4x512xf32, #tpu.memory_space<vmem>>, vector<1x128xf32>
    tpu.vector_store %arg4[%c3_140, %c128_141], %320 {strides = array<i32>} : memref<4x512xf32, #tpu.memory_space<vmem>>, vector<1x128xf32>,
    %c0_142 = arith.constant 0 : index
    %c256_143 = arith.constant 256 : index
    %322 = vector.load %arg4[%c0_142, %c256_143] : memref<4x512xf32, #tpu.memory_space<vmem>>, vector<1x128xf32>
    %c1_144 = arith.constant 1 : index
    %c256_145 = arith.constant 256 : index
    %323 = vector.load %arg4[%c1_144, %c256_145] : memref<4x512xf32, #tpu.memory_space<vmem>>, vector<1x128xf32>
    %324 = vector.broadcast %322 : vector<1x128xf32> to vector<64x128xf32>
    %325 = arith.mulf %259, %324 : vector<64x128xf32>
    %326 = arith.addf %256, %325 : vector<64x128xf32>
    %cst_146 = arith.constant 0.00999999977 : f32
    %327 = vector.broadcast %cst_146 : f32 to vector<64x128xf32>
    %328 = arith.mulf %327, %326 : vector<64x128xf32>
    %329 = arith.maximumf %326, %328 : vector<64x128xf32>
    %330 = vector.extract_strided_slice %329 {offsets = [0, 0], sizes = [32, 128], strides = [1, 1]} : vector<64x128xf32> to vector<32x128xf32>
    %331 = vector.extract_strided_slice %329 {offsets = [32, 0], sizes = [32, 128], strides = [1, 1]} : vector<64x128xf32> to vector<32x128xf32>
    %332 = arith.mulf %262, %330 : vector<32x128xf32>
    %cst_147 = arith.constant dense<0.000000e+00> : vector<128xf32>
    %333 = vector.multi_reduction <add>, %332, %cst_147 [0] : vector<32x128xf32> to vector<128xf32>
    %334 = vector.shape_cast %333 : vector<128xf32> to vector<1x128xf32>
    %335 = vector.broadcast %266 : f32 to vector<1x128xf32>
    %336 = arith.addf %334, %335 : vector<1x128xf32>
    %337 = arith.mulf %265, %331 : vector<32x128xf32>
    %cst_148 = arith.constant dense<0.000000e+00> : vector<128xf32>
    %338 = vector.multi_reduction <add>, %337, %cst_148 [0] : vector<32x128xf32> to vector<128xf32>
    %339 = vector.shape_cast %338 : vector<128xf32> to vector<1x128xf32>
    %340 = vector.broadcast %267 : f32 to vector<1x128xf32>
    %341 = arith.addf %339, %340 : vector<1x128xf32>
    %342 = math.exp %336 : vector<1x128xf32>
    %343 = arith.mulf %323, %342 : vector<1x128xf32>
    %344 = arith.addf %343, %341 : vector<1x128xf32>
    %c1_149 = arith.constant 1 : index
    %c256_150 = arith.constant 256 : index
    %345 = vector.load %arg4[%c1_149, %c256_150] : memref<4x512xf32, #tpu.memory_space<vmem>>, vector<1x128xf32>
    tpu.vector_store %arg4[%c1_149, %c256_150], %344 {strides = array<i32>} : memref<4x512xf32, #tpu.memory_space<vmem>>, vector<1x128xf32>,
    %c3_151 = arith.constant 3 : index
    %c256_152 = arith.constant 256 : index
    %346 = vector.load %arg4[%c3_151, %c256_152] : memref<4x512xf32, #tpu.memory_space<vmem>>, vector<1x128xf32>
    %347 = arith.addf %346, %336 : vector<1x128xf32>
    %c3_153 = arith.constant 3 : index
    %c256_154 = arith.constant 256 : index
    %348 = vector.load %arg4[%c3_153, %c256_154] : memref<4x512xf32, #tpu.memory_space<vmem>>, vector<1x128xf32>
    tpu.vector_store %arg4[%c3_153, %c256_154], %347 {strides = array<i32>} : memref<4x512xf32, #tpu.memory_space<vmem>>, vector<1x128xf32>,
    %c0_155 = arith.constant 0 : index
    %c384_156 = arith.constant 384 : index
    %349 = vector.load %arg4[%c0_155, %c384_156] : memref<4x512xf32, #tpu.memory_space<vmem>>, vector<1x128xf32>
    %c1_157 = arith.constant 1 : index
    %c384_158 = arith.constant 384 : index
    %350 = vector.load %arg4[%c1_157, %c384_158] : memref<4x512xf32, #tpu.memory_space<vmem>>, vector<1x128xf32>
    %351 = vector.broadcast %349 : vector<1x128xf32> to vector<64x128xf32>
    %352 = arith.mulf %259, %351 : vector<64x128xf32>
    %353 = arith.addf %256, %352 : vector<64x128xf32>
    %cst_159 = arith.constant 0.00999999977 : f32
    %354 = vector.broadcast %cst_159 : f32 to vector<64x128xf32>
    %355 = arith.mulf %354, %353 : vector<64x128xf32>
    %356 = arith.maximumf %353, %355 : vector<64x128xf32>
    %357 = vector.extract_strided_slice %356 {offsets = [0, 0], sizes = [32, 128], strides = [1, 1]} : vector<64x128xf32> to vector<32x128xf32>
    %358 = vector.extract_strided_slice %356 {offsets = [32, 0], sizes = [32, 128], strides = [1, 1]} : vector<64x128xf32> to vector<32x128xf32>
    %359 = arith.mulf %262, %357 : vector<32x128xf32>
    %cst_160 = arith.constant dense<0.000000e+00> : vector<128xf32>
    %360 = vector.multi_reduction <add>, %359, %cst_160 [0] : vector<32x128xf32> to vector<128xf32>
    %361 = vector.shape_cast %360 : vector<128xf32> to vector<1x128xf32>
    %362 = vector.broadcast %266 : f32 to vector<1x128xf32>
    %363 = arith.addf %361, %362 : vector<1x128xf32>
    %364 = arith.mulf %265, %358 : vector<32x128xf32>
    %cst_161 = arith.constant dense<0.000000e+00> : vector<128xf32>
    %365 = vector.multi_reduction <add>, %364, %cst_161 [0] : vector<32x128xf32> to vector<128xf32>
    %366 = vector.shape_cast %365 : vector<128xf32> to vector<1x128xf32>
    %367 = vector.broadcast %267 : f32 to vector<1x128xf32>
    %368 = arith.addf %366, %367 : vector<1x128xf32>
    %369 = math.exp %363 : vector<1x128xf32>
    %370 = arith.mulf %350, %369 : vector<1x128xf32>
    %371 = arith.addf %370, %368 : vector<1x128xf32>
    %c1_162 = arith.constant 1 : index
    %c384_163 = arith.constant 384 : index
    %372 = vector.load %arg4[%c1_162, %c384_163] : memref<4x512xf32, #tpu.memory_space<vmem>>, vector<1x128xf32>
    tpu.vector_store %arg4[%c1_162, %c384_163], %371 {strides = array<i32>} : memref<4x512xf32, #tpu.memory_space<vmem>>, vector<1x128xf32>,
    %c3_164 = arith.constant 3 : index
    %c384_165 = arith.constant 384 : index
    %373 = vector.load %arg4[%c3_164, %c384_165] : memref<4x512xf32, #tpu.memory_space<vmem>>, vector<1x128xf32>
    %374 = arith.addf %373, %363 : vector<1x128xf32>
    %c3_166 = arith.constant 3 : index
    %c384_167 = arith.constant 384 : index
    %375 = vector.load %arg4[%c3_166, %c384_167] : memref<4x512xf32, #tpu.memory_space<vmem>>, vector<1x128xf32>
    tpu.vector_store %arg4[%c3_166, %c384_167], %374 {strides = array<i32>} : memref<4x512xf32, #tpu.memory_space<vmem>>, vector<1x128xf32>,
    %c3_168 = arith.constant 3 : index
    %c0_169 = arith.constant 0 : index
    %c0_170 = arith.constant 0 : index
    %376 = vector.load %arg2[%c3_168, %c0_169, %c0_170] : memref<4x64x3xf32, #tpu.memory_space<vmem>>, vector<1x64x3xf32>
    %377 = vector.shape_cast %376 : vector<1x64x3xf32> to vector<64x3xf32>
    %378 = vector.extract_strided_slice %377 {offsets = [0, 1], sizes = [64, 1], strides = [1, 1]} : vector<64x3xf32> to vector<64x1xf32>
    %379 = vector.shape_cast %378 : vector<64x1xf32> to vector<64x1xf32>
    %380 = vector.broadcast %379 : vector<64x1xf32> to vector<64x128xf32>
    %381 = vector.extract_strided_slice %377 {offsets = [0, 0], sizes = [64, 1], strides = [1, 1]} : vector<64x3xf32> to vector<64x1xf32>
    %382 = vector.shape_cast %381 : vector<64x1xf32> to vector<64x1xf32>
    %383 = vector.broadcast %382 : vector<64x1xf32> to vector<64x128xf32>
    %384 = vector.extract_strided_slice %377 {offsets = [0, 2], sizes = [32, 1], strides = [1, 1]} : vector<64x3xf32> to vector<32x1xf32>
    %385 = vector.shape_cast %384 : vector<32x1xf32> to vector<32x1xf32>
    %386 = vector.broadcast %385 : vector<32x1xf32> to vector<32x128xf32>
    %387 = vector.extract_strided_slice %377 {offsets = [32, 2], sizes = [32, 1], strides = [1, 1]} : vector<64x3xf32> to vector<32x1xf32>
    %388 = vector.shape_cast %387 : vector<32x1xf32> to vector<32x1xf32>
    %389 = vector.broadcast %388 : vector<32x1xf32> to vector<32x128xf32>
    %c6 = arith.constant 6 : index
    %390 = memref.load %arg3[%c6] : memref<8xf32, #tpu.memory_space<smem>>
    %c7 = arith.constant 7 : index
    %391 = memref.load %arg3[%c7] : memref<8xf32, #tpu.memory_space<smem>>
    %c1_171 = arith.constant 1 : index
    %c0_172 = arith.constant 0 : index
    %392 = vector.load %arg4[%c1_171, %c0_172] : memref<4x512xf32, #tpu.memory_space<vmem>>, vector<1x128xf32>
    %c0_173 = arith.constant 0 : index
    %c0_174 = arith.constant 0 : index
    %393 = vector.load %arg4[%c0_173, %c0_174] : memref<4x512xf32, #tpu.memory_space<vmem>>, vector<1x128xf32>
    %394 = vector.broadcast %392 : vector<1x128xf32> to vector<64x128xf32>
    %395 = arith.mulf %383, %394 : vector<64x128xf32>
    %396 = arith.addf %380, %395 : vector<64x128xf32>
    %cst_175 = arith.constant 0.00999999977 : f32
    %397 = vector.broadcast %cst_175 : f32 to vector<64x128xf32>
    %398 = arith.mulf %397, %396 : vector<64x128xf32>
    %399 = arith.maximumf %396, %398 : vector<64x128xf32>
    %400 = vector.extract_strided_slice %399 {offsets = [0, 0], sizes = [32, 128], strides = [1, 1]} : vector<64x128xf32> to vector<32x128xf32>
    %401 = vector.extract_strided_slice %399 {offsets = [32, 0], sizes = [32, 128], strides = [1, 1]} : vector<64x128xf32> to vector<32x128xf32>
    %402 = arith.mulf %386, %400 : vector<32x128xf32>
    %cst_176 = arith.constant dense<0.000000e+00> : vector<128xf32>
    %403 = vector.multi_reduction <add>, %402, %cst_176 [0] : vector<32x128xf32> to vector<128xf32>
    %404 = vector.shape_cast %403 : vector<128xf32> to vector<1x128xf32>
    %405 = vector.broadcast %390 : f32 to vector<1x128xf32>
    %406 = arith.addf %404, %405 : vector<1x128xf32>
    %407 = arith.mulf %389, %401 : vector<32x128xf32>
    %cst_177 = arith.constant dense<0.000000e+00> : vector<128xf32>
    %408 = vector.multi_reduction <add>, %407, %cst_177 [0] : vector<32x128xf32> to vector<128xf32>
    %409 = vector.shape_cast %408 : vector<128xf32> to vector<1x128xf32>
    %410 = vector.broadcast %391 : f32 to vector<1x128xf32>
    %411 = arith.addf %409, %410 : vector<1x128xf32>
    %412 = math.exp %406 : vector<1x128xf32>
    %413 = arith.mulf %393, %412 : vector<1x128xf32>
    %414 = arith.addf %413, %411 : vector<1x128xf32>
    %c0_178 = arith.constant 0 : index
    %c0_179 = arith.constant 0 : index
    %415 = vector.load %arg4[%c0_178, %c0_179] : memref<4x512xf32, #tpu.memory_space<vmem>>, vector<1x128xf32>
    tpu.vector_store %arg4[%c0_178, %c0_179], %414 {strides = array<i32>} : memref<4x512xf32, #tpu.memory_space<vmem>>, vector<1x128xf32>,
    %c3_180 = arith.constant 3 : index
    %c0_181 = arith.constant 0 : index
    %416 = vector.load %arg4[%c3_180, %c0_181] : memref<4x512xf32, #tpu.memory_space<vmem>>, vector<1x128xf32>
    %417 = arith.addf %416, %406 : vector<1x128xf32>
    %c3_182 = arith.constant 3 : index
    %c0_183 = arith.constant 0 : index
    %418 = vector.load %arg4[%c3_182, %c0_183] : memref<4x512xf32, #tpu.memory_space<vmem>>, vector<1x128xf32>
    tpu.vector_store %arg4[%c3_182, %c0_183], %417 {strides = array<i32>} : memref<4x512xf32, #tpu.memory_space<vmem>>, vector<1x128xf32>,
    %c1_184 = arith.constant 1 : index
    %c128_185 = arith.constant 128 : index
    %419 = vector.load %arg4[%c1_184, %c128_185] : memref<4x512xf32, #tpu.memory_space<vmem>>, vector<1x128xf32>
    %c0_186 = arith.constant 0 : index
    %c128_187 = arith.constant 128 : index
    %420 = vector.load %arg4[%c0_186, %c128_187] : memref<4x512xf32, #tpu.memory_space<vmem>>, vector<1x128xf32>
    %421 = vector.broadcast %419 : vector<1x128xf32> to vector<64x128xf32>
    %422 = arith.mulf %383, %421 : vector<64x128xf32>
    %423 = arith.addf %380, %422 : vector<64x128xf32>
    %cst_188 = arith.constant 0.00999999977 : f32
    %424 = vector.broadcast %cst_188 : f32 to vector<64x128xf32>
    %425 = arith.mulf %424, %423 : vector<64x128xf32>
    %426 = arith.maximumf %423, %425 : vector<64x128xf32>
    %427 = vector.extract_strided_slice %426 {offsets = [0, 0], sizes = [32, 128], strides = [1, 1]} : vector<64x128xf32> to vector<32x128xf32>
    %428 = vector.extract_strided_slice %426 {offsets = [32, 0], sizes = [32, 128], strides = [1, 1]} : vector<64x128xf32> to vector<32x128xf32>
    %429 = arith.mulf %386, %427 : vector<32x128xf32>
    %cst_189 = arith.constant dense<0.000000e+00> : vector<128xf32>
    %430 = vector.multi_reduction <add>, %429, %cst_189 [0] : vector<32x128xf32> to vector<128xf32>
    %431 = vector.shape_cast %430 : vector<128xf32> to vector<1x128xf32>
    %432 = vector.broadcast %390 : f32 to vector<1x128xf32>
    %433 = arith.addf %431, %432 : vector<1x128xf32>
    %434 = arith.mulf %389, %428 : vector<32x128xf32>
    %cst_190 = arith.constant dense<0.000000e+00> : vector<128xf32>
    %435 = vector.multi_reduction <add>, %434, %cst_190 [0] : vector<32x128xf32> to vector<128xf32>
    %436 = vector.shape_cast %435 : vector<128xf32> to vector<1x128xf32>
    %437 = vector.broadcast %391 : f32 to vector<1x128xf32>
    %438 = arith.addf %436, %437 : vector<1x128xf32>
    %439 = math.exp %433 : vector<1x128xf32>
    %440 = arith.mulf %420, %439 : vector<1x128xf32>
    %441 = arith.addf %440, %438 : vector<1x128xf32>
    %c0_191 = arith.constant 0 : index
    %c128_192 = arith.constant 128 : index
    %442 = vector.load %arg4[%c0_191, %c128_192] : memref<4x512xf32, #tpu.memory_space<vmem>>, vector<1x128xf32>
    tpu.vector_store %arg4[%c0_191, %c128_192], %441 {strides = array<i32>} : memref<4x512xf32, #tpu.memory_space<vmem>>, vector<1x128xf32>,
    %c3_193 = arith.constant 3 : index
    %c128_194 = arith.constant 128 : index
    %443 = vector.load %arg4[%c3_193, %c128_194] : memref<4x512xf32, #tpu.memory_space<vmem>>, vector<1x128xf32>
    %444 = arith.addf %443, %433 : vector<1x128xf32>
    %c3_195 = arith.constant 3 : index
    %c128_196 = arith.constant 128 : index
    %445 = vector.load %arg4[%c3_195, %c128_196] : memref<4x512xf32, #tpu.memory_space<vmem>>, vector<1x128xf32>
    tpu.vector_store %arg4[%c3_195, %c128_196], %444 {strides = array<i32>} : memref<4x512xf32, #tpu.memory_space<vmem>>, vector<1x128xf32>,
    %c1_197 = arith.constant 1 : index
    %c256_198 = arith.constant 256 : index
    %446 = vector.load %arg4[%c1_197, %c256_198] : memref<4x512xf32, #tpu.memory_space<vmem>>, vector<1x128xf32>
    %c0_199 = arith.constant 0 : index
    %c256_200 = arith.constant 256 : index
    %447 = vector.load %arg4[%c0_199, %c256_200] : memref<4x512xf32, #tpu.memory_space<vmem>>, vector<1x128xf32>
    %448 = vector.broadcast %446 : vector<1x128xf32> to vector<64x128xf32>
    %449 = arith.mulf %383, %448 : vector<64x128xf32>
    %450 = arith.addf %380, %449 : vector<64x128xf32>
    %cst_201 = arith.constant 0.00999999977 : f32
    %451 = vector.broadcast %cst_201 : f32 to vector<64x128xf32>
    %452 = arith.mulf %451, %450 : vector<64x128xf32>
    %453 = arith.maximumf %450, %452 : vector<64x128xf32>
    %454 = vector.extract_strided_slice %453 {offsets = [0, 0], sizes = [32, 128], strides = [1, 1]} : vector<64x128xf32> to vector<32x128xf32>
    %455 = vector.extract_strided_slice %453 {offsets = [32, 0], sizes = [32, 128], strides = [1, 1]} : vector<64x128xf32> to vector<32x128xf32>
    %456 = arith.mulf %386, %454 : vector<32x128xf32>
    %cst_202 = arith.constant dense<0.000000e+00> : vector<128xf32>
    %457 = vector.multi_reduction <add>, %456, %cst_202 [0] : vector<32x128xf32> to vector<128xf32>
    %458 = vector.shape_cast %457 : vector<128xf32> to vector<1x128xf32>
    %459 = vector.broadcast %390 : f32 to vector<1x128xf32>
    %460 = arith.addf %458, %459 : vector<1x128xf32>
    %461 = arith.mulf %389, %455 : vector<32x128xf32>
    %cst_203 = arith.constant dense<0.000000e+00> : vector<128xf32>
    %462 = vector.multi_reduction <add>, %461, %cst_203 [0] : vector<32x128xf32> to vector<128xf32>
    %463 = vector.shape_cast %462 : vector<128xf32> to vector<1x128xf32>
    %464 = vector.broadcast %391 : f32 to vector<1x128xf32>
    %465 = arith.addf %463, %464 : vector<1x128xf32>
    %466 = math.exp %460 : vector<1x128xf32>
    %467 = arith.mulf %447, %466 : vector<1x128xf32>
    %468 = arith.addf %467, %465 : vector<1x128xf32>
    %c0_204 = arith.constant 0 : index
    %c256_205 = arith.constant 256 : index
    %469 = vector.load %arg4[%c0_204, %c256_205] : memref<4x512xf32, #tpu.memory_space<vmem>>, vector<1x128xf32>
    tpu.vector_store %arg4[%c0_204, %c256_205], %468 {strides = array<i32>} : memref<4x512xf32, #tpu.memory_space<vmem>>, vector<1x128xf32>,
    %c3_206 = arith.constant 3 : index
    %c256_207 = arith.constant 256 : index
    %470 = vector.load %arg4[%c3_206, %c256_207] : memref<4x512xf32, #tpu.memory_space<vmem>>, vector<1x128xf32>
    %471 = arith.addf %470, %460 : vector<1x128xf32>
    %c3_208 = arith.constant 3 : index
    %c256_209 = arith.constant 256 : index
    %472 = vector.load %arg4[%c3_208, %c256_209] : memref<4x512xf32, #tpu.memory_space<vmem>>, vector<1x128xf32>
    tpu.vector_store %arg4[%c3_208, %c256_209], %471 {strides = array<i32>} : memref<4x512xf32, #tpu.memory_space<vmem>>, vector<1x128xf32>,
    %c1_210 = arith.constant 1 : index
    %c384_211 = arith.constant 384 : index
    %473 = vector.load %arg4[%c1_210, %c384_211] : memref<4x512xf32, #tpu.memory_space<vmem>>, vector<1x128xf32>
    %c0_212 = arith.constant 0 : index
    %c384_213 = arith.constant 384 : index
    %474 = vector.load %arg4[%c0_212, %c384_213] : memref<4x512xf32, #tpu.memory_space<vmem>>, vector<1x128xf32>
    %475 = vector.broadcast %473 : vector<1x128xf32> to vector<64x128xf32>
    %476 = arith.mulf %383, %475 : vector<64x128xf32>
    %477 = arith.addf %380, %476 : vector<64x128xf32>
    %cst_214 = arith.constant 0.00999999977 : f32
    %478 = vector.broadcast %cst_214 : f32 to vector<64x128xf32>
    %479 = arith.mulf %478, %477 : vector<64x128xf32>
    %480 = arith.maximumf %477, %479 : vector<64x128xf32>
    %481 = vector.extract_strided_slice %480 {offsets = [0, 0], sizes = [32, 128], strides = [1, 1]} : vector<64x128xf32> to vector<32x128xf32>
    %482 = vector.extract_strided_slice %480 {offsets = [32, 0], sizes = [32, 128], strides = [1, 1]} : vector<64x128xf32> to vector<32x128xf32>
    %483 = arith.mulf %386, %481 : vector<32x128xf32>
    %cst_215 = arith.constant dense<0.000000e+00> : vector<128xf32>
    %484 = vector.multi_reduction <add>, %483, %cst_215 [0] : vector<32x128xf32> to vector<128xf32>
    %485 = vector.shape_cast %484 : vector<128xf32> to vector<1x128xf32>
    %486 = vector.broadcast %390 : f32 to vector<1x128xf32>
    %487 = arith.addf %485, %486 : vector<1x128xf32>
    %488 = arith.mulf %389, %482 : vector<32x128xf32>
    %cst_216 = arith.constant dense<0.000000e+00> : vector<128xf32>
    %489 = vector.multi_reduction <add>, %488, %cst_216 [0] : vector<32x128xf32> to vector<128xf32>
    %490 = vector.shape_cast %489 : vector<128xf32> to vector<1x128xf32>
    %491 = vector.broadcast %391 : f32 to vector<1x128xf32>
    %492 = arith.addf %490, %491 : vector<1x128xf32>
    %493 = math.exp %487 : vector<1x128xf32>
    %494 = arith.mulf %474, %493 : vector<1x128xf32>
    %495 = arith.addf %494, %492 : vector<1x128xf32>
    %c0_217 = arith.constant 0 : index
    %c384_218 = arith.constant 384 : index
    %496 = vector.load %arg4[%c0_217, %c384_218] : memref<4x512xf32, #tpu.memory_space<vmem>>, vector<1x128xf32>
    tpu.vector_store %arg4[%c0_217, %c384_218], %495 {strides = array<i32>} : memref<4x512xf32, #tpu.memory_space<vmem>>, vector<1x128xf32>,
    %c3_219 = arith.constant 3 : index
    %c384_220 = arith.constant 384 : index
    %497 = vector.load %arg4[%c3_219, %c384_220] : memref<4x512xf32, #tpu.memory_space<vmem>>, vector<1x128xf32>
    %498 = arith.addf %497, %487 : vector<1x128xf32>
    %c3_221 = arith.constant 3 : index
    %c384_222 = arith.constant 384 : index
    %499 = vector.load %arg4[%c3_221, %c384_222] : memref<4x512xf32, #tpu.memory_space<vmem>>, vector<1x128xf32>
    tpu.vector_store %arg4[%c3_221, %c384_222], %498 {strides = array<i32>} : memref<4x512xf32, #tpu.memory_space<vmem>>, vector<1x128xf32>,
    %c0_223 = arith.constant 0 : index
    %c0_224 = arith.constant 0 : index
    %500 = vector.load %arg4[%c0_223, %c0_224] : memref<4x512xf32, #tpu.memory_space<vmem>>, vector<2x128xf32>
    %501 = arith.mulf %500, %500 : vector<2x128xf32>
    %cst_225 = arith.constant dense<0.000000e+00> : vector<128xf32>
    %502 = vector.multi_reduction <add>, %501, %cst_225 [0] : vector<2x128xf32> to vector<128xf32>
    %503 = vector.shape_cast %502 : vector<128xf32> to vector<1x128xf32>
    %cst_226 = arith.constant 5.000000e-01 : f32
    %504 = vector.broadcast %cst_226 : f32 to vector<1x128xf32>
    %505 = arith.mulf %504, %503 : vector<1x128xf32>
    %cst_227 = arith.constant -1.83787704 : f32
    %506 = vector.broadcast %cst_227 : f32 to vector<1x128xf32>
    %507 = arith.subf %506, %505 : vector<1x128xf32>
    %c2_228 = arith.constant 2 : index
    %c0_229 = arith.constant 0 : index
    %508 = vector.load %arg4[%c2_228, %c0_229] : memref<4x512xf32, #tpu.memory_space<vmem>>, vector<1x128xf32>
    tpu.vector_store %arg4[%c2_228, %c0_229], %507 {strides = array<i32>} : memref<4x512xf32, #tpu.memory_space<vmem>>, vector<1x128xf32>,
    %c0_230 = arith.constant 0 : index
    %c128_231 = arith.constant 128 : index
    %509 = vector.load %arg4[%c0_230, %c128_231] : memref<4x512xf32, #tpu.memory_space<vmem>>, vector<2x128xf32>
    %510 = arith.mulf %509, %509 : vector<2x128xf32>
    %cst_232 = arith.constant dense<0.000000e+00> : vector<128xf32>
    %511 = vector.multi_reduction <add>, %510, %cst_232 [0] : vector<2x128xf32> to vector<128xf32>
    %512 = vector.shape_cast %511 : vector<128xf32> to vector<1x128xf32>
    %cst_233 = arith.constant 5.000000e-01 : f32
    %513 = vector.broadcast %cst_233 : f32 to vector<1x128xf32>
    %514 = arith.mulf %513, %512 : vector<1x128xf32>
    %cst_234 = arith.constant -1.83787704 : f32
    %515 = vector.broadcast %cst_234 : f32 to vector<1x128xf32>
    %516 = arith.subf %515, %514 : vector<1x128xf32>
    %c2_235 = arith.constant 2 : index
    %c128_236 = arith.constant 128 : index
    %517 = vector.load %arg4[%c2_235, %c128_236] : memref<4x512xf32, #tpu.memory_space<vmem>>, vector<1x128xf32>
    tpu.vector_store %arg4[%c2_235, %c128_236], %516 {strides = array<i32>} : memref<4x512xf32, #tpu.memory_space<vmem>>, vector<1x128xf32>,
    %c0_237 = arith.constant 0 : index
    %c256_238 = arith.constant 256 : index
    %518 = vector.load %arg4[%c0_237, %c256_238] : memref<4x512xf32, #tpu.memory_space<vmem>>, vector<2x128xf32>
    %519 = arith.mulf %518, %518 : vector<2x128xf32>
    %cst_239 = arith.constant dense<0.000000e+00> : vector<128xf32>
    %520 = vector.multi_reduction <add>, %519, %cst_239 [0] : vector<2x128xf32> to vector<128xf32>
    %521 = vector.shape_cast %520 : vector<128xf32> to vector<1x128xf32>
    %cst_240 = arith.constant 5.000000e-01 : f32
    %522 = vector.broadcast %cst_240 : f32 to vector<1x128xf32>
    %523 = arith.mulf %522, %521 : vector<1x128xf32>
    %cst_241 = arith.constant -1.83787704 : f32
    %524 = vector.broadcast %cst_241 : f32 to vector<1x128xf32>
    %525 = arith.subf %524, %523 : vector<1x128xf32>
    %c2_242 = arith.constant 2 : index
    %c256_243 = arith.constant 256 : index
    %526 = vector.load %arg4[%c2_242, %c256_243] : memref<4x512xf32, #tpu.memory_space<vmem>>, vector<1x128xf32>
    tpu.vector_store %arg4[%c2_242, %c256_243], %525 {strides = array<i32>} : memref<4x512xf32, #tpu.memory_space<vmem>>, vector<1x128xf32>,
    %c0_244 = arith.constant 0 : index
    %c384_245 = arith.constant 384 : index
    %527 = vector.load %arg4[%c0_244, %c384_245] : memref<4x512xf32, #tpu.memory_space<vmem>>, vector<2x128xf32>
    %528 = arith.mulf %527, %527 : vector<2x128xf32>
    %cst_246 = arith.constant dense<0.000000e+00> : vector<128xf32>
    %529 = vector.multi_reduction <add>, %528, %cst_246 [0] : vector<2x128xf32> to vector<128xf32>
    %530 = vector.shape_cast %529 : vector<128xf32> to vector<1x128xf32>
    %cst_247 = arith.constant 5.000000e-01 : f32
    %531 = vector.broadcast %cst_247 : f32 to vector<1x128xf32>
    %532 = arith.mulf %531, %530 : vector<1x128xf32>
    %cst_248 = arith.constant -1.83787704 : f32
    %533 = vector.broadcast %cst_248 : f32 to vector<1x128xf32>
    %534 = arith.subf %533, %532 : vector<1x128xf32>
    %c2_249 = arith.constant 2 : index
    %c384_250 = arith.constant 384 : index
    %535 = vector.load %arg4[%c2_249, %c384_250] : memref<4x512xf32, #tpu.memory_space<vmem>>, vector<1x128xf32>
    tpu.vector_store %arg4[%c2_249, %c384_250], %534 {strides = array<i32>} : memref<4x512xf32, #tpu.memory_space<vmem>>, vector<1x128xf32>,
    return
  }
  func.func @transform_0(%arg0: i32) -> (i32, i32) {
    %c0_i32 = arith.constant 0 : i32
    %c0_i32_0 = arith.constant 0 : i32
    return %c0_i32, %arg0 : i32, i32
  }
  func.func @transform_1(%arg0: i32) -> (i32, i32, i32) {
    %c0_i32 = arith.constant 0 : i32
    %c0_i32_0 = arith.constant 0 : i32
    %c0_i32_1 = arith.constant 0 : i32
    %c0_i32_2 = arith.constant 0 : i32
    return %c0_i32, %c0_i32_0, %c0_i32_1 : i32, i32, i32
  }
  func.func @transform_2(%arg0: i32) -> i32 {
    %c0_i32 = arith.constant 0 : i32
    %c0_i32_0 = arith.constant 0 : i32
    return %c0_i32 : i32
  }
  func.func @transform_3(%arg0: i32) -> (i32, i32) {
    %c0_i32 = arith.constant 0 : i32
    %c0_i32_0 = arith.constant 0 : i32
    return %c0_i32, %arg0 : i32, i32
  }
}

</mosaic_0001>

<llo_original>
// kernel: stacked_nvp_forward.1
$region0: #{stacked_nvp_forward.1}
  #allocation0 [shape = 'u32[]', space=smem, size = 0x4, offset = 0x4, fixed_abs, tag = 'smem constant byte address 0x4 - core index']
  #allocation1 [shape = 'u32[144,128]{1,0:T(1,128)}', space=vmem, size = 0x12000, scoped, tag = 'internal scratch']
  %s0 = inlined_call_operand.vmem [shape: f32[2,1024], index: 0, kind: input, shape index: {}]
  %s1 = inlined_call_operand.vmem [shape: f32[4,64,3], index: 1, kind: input, shape index: {}]
  %s2 = inlined_call_operand.vmem [shape: f32[8], index: 2, kind: input, shape index: {}]
  %s3 = inlined_call_operand.vmem [shape: f32[4,1024], index: 3, kind: output, shape index: {}]
  %s4 = sld [smem:[#allocation0]]
  $region49: #{stacked_nvp_forward.1} parent=0
    _
  %s6 = ssub.s32 1, %s4
  %s7 = scalar_select 0, %s6, %s4
  $region1: #{stacked_nvp_forward.1} parent=0
    #allocation2 [shape = 'u8[512]{0}', space=smem, size = 0x200, scoped, tag = 'input window, operand 2, single buffered']
    #allocation3 [shape = 's32[2]{0}', space=sflag, size = 0x8, scoped, tag = 'scoped memory for stacked_nvp_forward.1']
    %8 = vsyncpa [#allocation3], 0
    loop: start=0, step=1, limit=4
    $region2: #{stacked_nvp_forward.1} parent=1 // loop_pre_header
      _
    $region3: #{stacked_nvp_forward.1} parent=1 // loop_header
      %s10 = sphi 0, %s14
      %p11 = scmp.ge.s32.totalorder %s10, 4
      %s20 = sphi 0, %s22
      %s23 = sphi 0, %s20
      %s24 = sphi 0, %s23
      %s40 = sphi 0, %s24
      %s44 = sphi 0, %s44
      %s46 = sphi 0, %s44
      %s47 = sphi 0, %s46
      %s61 = sphi 0, %s47
      %s65 = sphi 0, %s65
      %s67 = sphi 0, %s65
      %s68 = sphi 0, %s67
      %s82 = sphi 0, %s68
      %s88 = sphi 0, %s90
      %s91 = sphi 0, %s88
      %s92 = sphi 0, %s91
      %s108 = sphi 0, %s92
    $region4: #{stacked_nvp_forward.1} parent=1 // loop_header_branch
      %13 = sbr.rel (%p11) target = $region8
    $region5: #{stacked_nvp_forward.1} parent=1 // loop_body
      %s15 = ssub.s32 %s10, 1
      %s16 = ssub.s32 %s10, 2
      %s17 = sadd.s32 %s10, 1
      %s18 = ssub.s32 %s10, %s17
      %p19 = scmp.eq.s32.totalorder %s18, 0
      %s21 = sadd.s32 %s20, 1
      %s22 = scalar_select %p19, %s20, %s21
      %p25 = pneg %p19
      %p26 = scmp.eq.s32.totalorder %s10, 1
      %p27 = por %p25, %p26
      %p28 = scmp.ne.s32.totalorder %s20, %s23
      %p29 = scmp.eq.s32.totalorder %s10, 0
      %p30 = por %p28, %p29
      %p31 = scmp.ne.s32.totalorder %s20, %s23
      %p32 = scmp.eq.s32.totalorder %s15, 1
      %p33 = por %p31, %p32
      %p34 = scmp.ne.s32.totalorder %s23, %s24
      %p35 = scmp.eq.s32.totalorder %s15, 0
      %p36 = por %p34, %p35
      %p37 = scmp.ne.s32.totalorder %s23, %s24
      %p38 = scmp.eq.s32.totalorder %s16, 1
      %p39 = por %p37, %p38
      %p41 = scmp.ne.s32.totalorder %s24, %s40
      %p42 = scmp.eq.s32.totalorder %s16, 0
      %p43 = por %p41, %p42
      %s45 = sadd.s32 %s44, 1
      %p48 = scmp.eq.s32.totalorder %s10, 1
      %p49 = scmp.ne.s32.totalorder %s44, %s46
      %p50 = scmp.eq.s32.totalorder %s10, 0
      %p51 = por %p49, %p50
      %p52 = scmp.ne.s32.totalorder %s44, %s46
      %p53 = scmp.eq.s32.totalorder %s15, 1
      %p54 = por %p52, %p53
      %p55 = scmp.ne.s32.totalorder %s46, %s47
      %p56 = scmp.eq.s32.totalorder %s15, 0
      %p57 = por %p55, %p56
      %p58 = scmp.ne.s32.totalorder %s46, %s47
      %p59 = scmp.eq.s32.totalorder %s16, 1
      %p60 = por %p58, %p59
      %p62 = scmp.ne.s32.totalorder %s47, %s61
      %p63 = scmp.eq.s32.totalorder %s16, 0
      %p64 = por %p62, %p63
      %s66 = sadd.s32 %s65, 1
      %p69 = scmp.eq.s32.totalorder %s10, 1
      %p70 = scmp.ne.s32.totalorder %s65, %s67
      %p71 = scmp.eq.s32.totalorder %s10, 0
      %p72 = por %p70, %p71
      %p73 = scmp.ne.s32.totalorder %s65, %s67
      %p74 = scmp.eq.s32.totalorder %s15, 1
      %p75 = por %p73, %p74
      %p76 = scmp.ne.s32.totalorder %s67, %s68
      %p77 = scmp.eq.s32.totalorder %s15, 0
      %p78 = por %p76, %p77
      %p79 = scmp.ne.s32.totalorder %s67, %s68
      %p80 = scmp.eq.s32.totalorder %s16, 1
      %p81 = por %p79, %p80
      %p83 = scmp.ne.s32.totalorder %s68, %s82
      %p84 = scmp.eq.s32.totalorder %s16, 0
      %p85 = por %p83, %p84
      %s86 = ssub.s32 %s10, %s17
      %p87 = scmp.eq.s32.totalorder %s86, 0
      %s89 = sadd.s32 %s88, 1
      %s90 = scalar_select %p87, %s88, %s89
      %p93 = pneg %p87
      %p94 = scmp.eq.s32.totalorder %s10, 1
      %p95 = por %p93, %p94
      %p96 = scmp.ne.s32.totalorder %s88, %s91
      %p97 = scmp.eq.s32.totalorder %s10, 0
      %p98 = por %p96, %p97
      %p99 = scmp.ne.s32.totalorder %s88, %s91
      %p100 = scmp.eq.s32.totalorder %s15, 1
      %p101 = por %p99, %p100
      %p102 = scmp.ne.s32.totalorder %s91, %s92
      %p103 = scmp.eq.s32.totalorder %s15, 0
      %p104 = por %p102, %p103
      %p105 = scmp.ne.s32.totalorder %s91, %s92
      %p106 = scmp.eq.s32.totalorder %s16, 1
      %p107 = por %p105, %p106
      %p109 = scmp.ne.s32.totalorder %s92, %s108
      %p110 = scmp.eq.s32.totalorder %s16, 0
      %p111 = por %p109, %p110
      %p112 = scmp.le.s32.totalorder 1, %s10
      %p113 = scmp.lt.s32.totalorder %s10, 3
      %p114 = pnand %p112, %p113
      %p115 = pneg %p114
      // Predicated region
      $region9: #{stacked_nvp_forward.1} parent=5 // pred_check
        _
      $region10: #{stacked_nvp_forward.1} parent=5 // pred_check_branch
        %117 = sbr.rel (%p114) target = $region12
      $region11: #{stacked_nvp_forward.1} parent=5 // pred_region
        %s118 = ssub.s32 %s10, 1
        // Predicated region
        $region13: #{stacked_nvp_forward.1} parent=11 // pred_check
          %p119 = pneg %p57
        $region14: #{stacked_nvp_forward.1} parent=11 // pred_check_branch
          %121 = sbr.rel (%p119) target = $region16
        $region15: #{stacked_nvp_forward.1} parent=11 // pred_region
          _
        $region16: #{stacked_nvp_forward.1} parent=11 // pred_fallthru
          _
        // Predicated region
        $region17: #{stacked_nvp_forward.1} parent=11 // pred_check
          %p122 = pneg %p78
        $region18: #{stacked_nvp_forward.1} parent=11 // pred_check_branch
          %124 = sbr.rel (%p122) target = $region20
        $region19: #{stacked_nvp_forward.1} parent=11 // pred_region
          %s126 = ssub.s32 16, 16
          %127 = vsyncadd [#allocation3], %s126
          %s129 = sshll.u32 %s2, 4
          %s130 = int_to_ptr.vmem [resolvable:$true] %s129
          %132 = dma.vmem_to_smem %s130, 16, [#allocation2], [#allocation3]
        $region20: #{stacked_nvp_forward.1} parent=11 // pred_fallthru
          _
      $region12: #{stacked_nvp_forward.1} parent=5 // pred_fallthru
        _
      %p133 = scmp.lt.s32.totalorder %s10, 2
      // Predicated region
      $region21: #{stacked_nvp_forward.1} parent=5 // pred_check
        %p134 = pneg %p133
      $region22: #{stacked_nvp_forward.1} parent=5 // pred_check_branch
        %136 = sbr.rel (%p134) target = $region24
      $region23: #{stacked_nvp_forward.1} parent=5 // pred_region
        // Predicated region
        $region25: #{stacked_nvp_forward.1} parent=23 // pred_check
          %p137 = pneg %p30
        $region26: #{stacked_nvp_forward.1} parent=23 // pred_check_branch
          %139 = sbr.rel (%p137) target = $region28
        $region27: #{stacked_nvp_forward.1} parent=23 // pred_region
          %s140 = smul.u32 4, %s10
          %p141 = scmp.lt.s32.totalorder %s140, 7
          %s142 = scalar_select %p141, %s140, 7
          %s143 = smul.addr %s142, 2
          %s144 = scalar_lea.vmem %s0, %s143
          %s145 = smul.u32 4, %s10
        $region28: #{stacked_nvp_forward.1} parent=23 // pred_fallthru
          _
      $region24: #{stacked_nvp_forward.1} parent=5 // pred_fallthru
        _
      %p146 = scmp.le.s32.totalorder 1, %s10
      %p147 = scmp.lt.s32.totalorder %s10, 3
      %p148 = pnand %p146, %p147
      %p149 = pneg %p148
      // Predicated region
      $region29: #{stacked_nvp_forward.1} parent=5 // pred_check
        _
      $region30: #{stacked_nvp_forward.1} parent=5 // pred_check_branch
        %151 = sbr.rel (%p148) target = $region32
      $region31: #{stacked_nvp_forward.1} parent=5 // pred_region
        %s152 = ssub.s32 %s10, 1
        // Predicated region
        $region33: #{stacked_nvp_forward.1} parent=31 // pred_check
          %p153 = pneg %p78
        $region34: #{stacked_nvp_forward.1} parent=31 // pred_check_branch
          %155 = sbr.rel (%p153) target = $region36
        $region35: #{stacked_nvp_forward.1} parent=31 // pred_region
          %156 = dma.done [#allocation3], 16
        $region36: #{stacked_nvp_forward.1} parent=31 // pred_fallthru
          _
        %157 = sfence
        %s158 = smul.u32 4, %s15
        %p159 = scmp.lt.s32.totalorder %s158, 7
        %s160 = scalar_select %p159, %s158, 7
        %s161 = smul.addr %s160, 2
        %s162 = scalar_lea.vmem %s0, %s161
        %p163 = pneg %p36
        %p164 = pneg %p33
        %p165 = pneg %p57
        %p166 = pneg %p54
        %p167 = pneg %p78
        %p168 = pneg %p75
        %p169 = pneg %p104
        %p170 = pneg %p101
        %s171 = smul.u32 4, %s15
        %p172 = scmp.lt.s32.totalorder %s171, 7
        %s173 = scalar_select %p172, %s171, 7
        %s174 = smul.addr %s173, 4
        %s175 = scalar_lea.vmem %s3, %s174
        %s176 = smul.u32 4, %s15
        %p177 = scmp.lt.s32.totalorder %s176, 7
        %s178 = scalar_select %p177, %s176, 7
        %s179 = smul.addr %s178, 2
        %s180 = scalar_lea.vmem %s0, %s179
        %s181 = smul.u32 4, %s15
        %s182 = smul.u32 4, %s15
        %p183 = scmp.lt.s32.totalorder %s182, 7
        %s184 = scalar_select %p183, %s182, 7
        %s185 = smul.addr %s184, 4
        %s186 = scalar_lea.vmem %s3, %s185
        %s187 = smul.u32 4, %s15
        %v188 = vld [vmem:[%s180] sm:$0xff]
        %v190 = vcombine.high %v188, %v188
        %v192 = vunpack.c.l.s4 1983009808
        %v193 = vunpack.c.0.s8 %v192
        %v194 = vlaneseq
        %v195 = vshrl.u32 %v194, 7
        %v196 = vsub.s32 %v193, %v195
        %v197 = vrot.slane %v188, %v196
        %v199 = vunpack.c.l.s4 1983009808
        %v200 = vunpack.c.0.s8 %v199
        %v201 = vlaneseq
        %v202 = vshrl.u32 %v201, 7
        %v203 = vsub.s32 %v200, %v202
        %v204 = vrot.slane %v190, %v203
        %207 = vst [vmem:[%s186] sm:$0x33] %v197
        %208 = vst [vmem:[%s186 + $0x8] sm:$0x33] %v204
        %v209 = vlaneseq
        %vm210 = vcmp.ge.s32.totalorder %v209, 0
        %vm211 = vcmp.lt.s32.totalorder %v209, 512
        %vm212 = vmand %vm210, %vm211
        %s213 = scalar_lea.vmem %s186, 3
        %214 = vst.msk [vmem:[%s213] ss:$4 sm:$0xf] %vm212, 0.0
        %v215 = vld [vmem:[%s1] sm:$0xff]
        %v216 = vld [vmem:[%s1 + $0x8] sm:$0xff]
        %v217 = vld [vmem:[%s1 + $0x10] sm:$0xff]
        %v218 = vld [vmem:[%s1 + $0x18] sm:$0xff]
        %v219 = vld [vmem:[%s1 + $0x20] sm:$0xff]
        %v220 = vld [vmem:[%s1 + $0x28] sm:$0xff]
        %v221 = vld [vmem:[%s1 + $0x30] sm:$0xff]
        %v222 = vld [vmem:[%s1 + $0x38] sm:$0xff]
        %224 = vset.pattern.permute.xlu0 1
        %225 = vperm.xlu0 %224, %v215
        %v226 = vpop.permute.xlu0 %225
        %229 = vset.pattern.permute.xlu0 1
        %230 = vperm.xlu0 %229, %v216
        %v231 = vpop.permute.xlu0 %230
        %234 = vset.pattern.permute.xlu0 1
        %235 = vperm.xlu0 %234, %v217
        %v236 = vpop.permute.xlu0 %235
        %239 = vset.pattern.permute.xlu0 1
        %240 = vperm.xlu0 %239, %v218
        %v241 = vpop.permute.xlu0 %240
        %244 = vset.pattern.permute.xlu0 1
        %245 = vperm.xlu0 %244, %v219
        %v246 = vpop.permute.xlu0 %245
        %249 = vset.pattern.permute.xlu0 1
        %250 = vperm.xlu0 %249, %v220
        %v251 = vpop.permute.xlu0 %250
        %254 = vset.pattern.permute.xlu0 1
        %255 = vperm.xlu0 %254, %v221
        %v256 = vpop.permute.xlu0 %255
        %259 = vset.pattern.permute.xlu0 1
        %260 = vperm.xlu0 %259, %v222
        %v261 = vpop.permute.xlu0 %260
        %263 = vset.pattern.permute.xlu0 0
        %264 = vperm.xlu0 %263, %v215
        %v265 = vpop.permute.xlu0 %264
        %267 = vset.pattern.permute.xlu0 0
        %268 = vperm.xlu0 %267, %v216
        %v269 = vpop.permute.xlu0 %268
        %271 = vset.pattern.permute.xlu0 0
        %272 = vperm.xlu0 %271, %v217
        %v273 = vpop.permute.xlu0 %272
        %275 = vset.pattern.permute.xlu0 0
        %276 = vperm.xlu0 %275, %v218
        %v277 = vpop.permute.xlu0 %276
        %279 = vset.pattern.permute.xlu0 0
        %280 = vperm.xlu0 %279, %v219
        %v281 = vpop.permute.xlu0 %280
        %283 = vset.pattern.permute.xlu0 0
        %284 = vperm.xlu0 %283, %v220
        %v285 = vpop.permute.xlu0 %284
        %287 = vset.pattern.permute.xlu0 0
        %288 = vperm.xlu0 %287, %v221
        %v289 = vpop.permute.xlu0 %288
        %291 = vset.pattern.permute.xlu0 0
        %292 = vperm.xlu0 %291, %v222
        %v293 = vpop.permute.xlu0 %292
        %295 = vset.pattern.permute.xlu0 2
        %296 = vperm.xlu0 %295, %v215
        %v297 = vpop.permute.xlu0 %296
        %299 = vset.pattern.permute.xlu0 2
        %300 = vperm.xlu0 %299, %v216
        %v301 = vpop.permute.xlu0 %300
        %303 = vset.pattern.permute.xlu0 2
        %304 = vperm.xlu0 %303, %v217
        %v305 = vpop.permute.xlu0 %304
        %307 = vset.pattern.permute.xlu0 2
        %308 = vperm.xlu0 %307, %v218
        %v309 = vpop.permute.xlu0 %308
        %311 = vset.pattern.permute.xlu0 2
        %312 = vperm.xlu0 %311, %v219
        %v313 = vpop.permute.xlu0 %312
        %315 = vset.pattern.permute.xlu0 2
        %316 = vperm.xlu0 %315, %v220
        %v317 = vpop.permute.xlu0 %316
        %319 = vset.pattern.permute.xlu0 2
        %320 = vperm.xlu0 %319, %v221
        %v321 = vpop.permute.xlu0 %320
        %323 = vset.pattern.permute.xlu0 2
        %324 = vperm.xlu0 %323, %v222
        %v325 = vpop.permute.xlu0 %324
        %s327 = sld [smem:[#allocation2]]
        %s328 = sld [smem:[#allocation2 + $0x1]]
        %v329 = vld [vmem:[%s186] sm:$0x1]
        %v330 = vld [vmem:[%s186 + $0x1] sm:$0x1]
        %v331 = vlaneseq
        %v332 = vshrl.u32 %v331, 7
        %v333 = vsub.s32 0, %v332
        %v334 = vrot.slane %v329, %v333
        %v335 = vmul.f32 %v265, %v334
        %v336 = vmul.f32 %v269, %v334
        %v337 = vmul.f32 %v273, %v334
        %v338 = vmul.f32 %v277, %v334
        %v339 = vmul.f32 %v281, %v334
        %v340 = vmul.f32 %v285, %v334
        %v341 = vmul.f32 %v289, %v334
        %v342 = vmul.f32 %v293, %v334
        %v343 = vadd.f32 %v226, %v335
        %v344 = vadd.f32 %v231, %v336
        %v345 = vadd.f32 %v236, %v337
        %v346 = vadd.f32 %v241, %v338
        %v347 = vadd.f32 %v246, %v339
        %v348 = vadd.f32 %v251, %v340
        %v349 = vadd.f32 %v256, %v341
        %v350 = vadd.f32 %v261, %v342
        %v351 = vmul.f32 %v343, 0.01
        %v352 = vmul.f32 %v344, 0.01
        %v353 = vmul.f32 %v345, 0.01
        %v354 = vmul.f32 %v346, 0.01
        %v355 = vmul.f32 %v347, 0.01
        %v356 = vmul.f32 %v348, 0.01
        %v357 = vmul.f32 %v349, 0.01
        %v358 = vmul.f32 %v350, 0.01
        %v359 = vmax.f32 %v343, %v351
        %v360 = vmax.f32 %v344, %v352
        %v361 = vmax.f32 %v345, %v353
        %v362 = vmax.f32 %v346, %v354
        %v363 = vmax.f32 %v347, %v355
        %v364 = vmax.f32 %v348, %v356
        %v365 = vmax.f32 %v349, %v357
        %v366 = vmax.f32 %v350, %v358
        %v367 = vmul.f32 %v297, %v359
        %v368 = vmul.f32 %v301, %v360
        %v369 = vmul.f32 %v305, %v361
        %v370 = vmul.f32 %v309, %v362
        %v371 = vadd.f32 %v367, %v368
        %v372 = vadd.f32 %v371, %v369
        %v373 = vadd.f32 %v372, %v370
        %v374 = vrot.slane %v373, 4
        %v375 = vadd.f32 %v373, %v374
        %v376 = vrot.slane %v375, 2
        %v377 = vadd.f32 %v375, %v376
        %v378 = vrot.slane %v377, 1
        %v379 = vadd.f32 %v377, %v378
        %v380 = vstv %s327
        %v381 = vadd.f32 %v379, %v380
        %v382 = vmul.f32 %v313, %v363
        %v383 = vmul.f32 %v317, %v364
        %v384 = vmul.f32 %v321, %v365
        %v385 = vmul.f32 %v325, %v366
        %v386 = vadd.f32 %v382, %v383
        %v387 = vadd.f32 %v386, %v384
        %v388 = vadd.f32 %v387, %v385
        %v389 = vrot.slane %v388, 4
        %v390 = vadd.f32 %v388, %v389
        %v391 = vrot.slane %v390, 2
        %v392 = vadd.f32 %v390, %v391
        %v393 = vrot.slane %v392, 1
        %v394 = vadd.f32 %v392, %v393
        %v395 = vstv %s328
        %v396 = vadd.f32 %v394, %v395
        %v397 = vmul.f32 %v381, 1.442695
        %v398 = vpow.pop %v397
        %v399 = vmul.f32 %v330, %v398
        %v400 = vadd.f32 %v399, %v396
        %401 = vst [vmem:[%s186 + $0x1] sm:$0x1] %v400
        %v402 = vld [vmem:[%s186 + $0x3] sm:$0x1]
        %v403 = vadd.f32 %v402, %v381
        %404 = vst [vmem:[%s186 + $0x3] sm:$0x1] %v403
        %v405 = vld [vmem:[%s186 + $0x4] sm:$0x1]
        %v406 = vld [vmem:[%s186 + $0x5] sm:$0x1]
        %v407 = vlaneseq
        %v408 = vshrl.u32 %v407, 7
        %v409 = vsub.s32 0, %v408
        %v410 = vrot.slane %v405, %v409
        %v411 = vmul.f32 %v265, %v410
        %v412 = vmul.f32 %v269, %v410
        %v413 = vmul.f32 %v273, %v410
        %v414 = vmul.f32 %v277, %v410
        %v415 = vmul.f32 %v281, %v410
        %v416 = vmul.f32 %v285, %v410
        %v417 = vmul.f32 %v289, %v410
        %v418 = vmul.f32 %v293, %v410
        %v419 = vadd.f32 %v226, %v411
        %v420 = vadd.f32 %v231, %v412
        %v421 = vadd.f32 %v236, %v413
        %v422 = vadd.f32 %v241, %v414
        %v423 = vadd.f32 %v246, %v415
        %v424 = vadd.f32 %v251, %v416
        %v425 = vadd.f32 %v256, %v417
        %v426 = vadd.f32 %v261, %v418
        %v427 = vmul.f32 %v419, 0.01
        %v428 = vmul.f32 %v420, 0.01
        %v429 = vmul.f32 %v421, 0.01
        %v430 = vmul.f32 %v422, 0.01
        %v431 = vmul.f32 %v423, 0.01
        %v432 = vmul.f32 %v424, 0.01
        %v433 = vmul.f32 %v425, 0.01
        %v434 = vmul.f32 %v426, 0.01
        %v435 = vmax.f32 %v419, %v427
        %v436 = vmax.f32 %v420, %v428
        %v437 = vmax.f32 %v421, %v429
        %v438 = vmax.f32 %v422, %v430
        %v439 = vmax.f32 %v423, %v431
        %v440 = vmax.f32 %v424, %v432
        %v441 = vmax.f32 %v425, %v433
        %v442 = vmax.f32 %v426, %v434
        %v443 = vmul.f32 %v297, %v435
        %v444 = vmul.f32 %v301, %v436
        %v445 = vmul.f32 %v305, %v437
        %v446 = vmul.f32 %v309, %v438
        %v447 = vadd.f32 %v443, %v444
        %v448 = vadd.f32 %v447, %v445
        %v449 = vadd.f32 %v448, %v446
        %v450 = vrot.slane %v449, 4
        %v451 = vadd.f32 %v449, %v450
        %v452 = vrot.slane %v451, 2
        %v453 = vadd.f32 %v451, %v452
        %v454 = vrot.slane %v453, 1
        %v455 = vadd.f32 %v453, %v454
        %v456 = vadd.f32 %v455, %v380
        %v457 = vmul.f32 %v313, %v439
        %v458 = vmul.f32 %v317, %v440
        %v459 = vmul.f32 %v321, %v441
        %v460 = vmul.f32 %v325, %v442
        %v461 = vadd.f32 %v457, %v458
        %v462 = vadd.f32 %v461, %v459
        %v463 = vadd.f32 %v462, %v460
        %v464 = vrot.slane %v463, 4
        %v465 = vadd.f32 %v463, %v464
        %v466 = vrot.slane %v465, 2
        %v467 = vadd.f32 %v465, %v466
        %v468 = vrot.slane %v467, 1
        %v469 = vadd.f32 %v467, %v468
        %v470 = vadd.f32 %v469, %v395
        %v471 = vmul.f32 %v456, 1.442695
        %v472 = vpow.pop %v471
        %v473 = vmul.f32 %v406, %v472
        %v474 = vadd.f32 %v473, %v470
        %475 = vst [vmem:[%s186 + $0x5] sm:$0x1] %v474
        %v476 = vld [vmem:[%s186 + $0x7] sm:$0x1]
        %v477 = vadd.f32 %v476, %v456
        %478 = vst [vmem:[%s186 + $0x7] sm:$0x1] %v477
        %v479 = vld [vmem:[%s186 + $0x8] sm:$0x1]
        %v480 = vld [vmem:[%s186 + $0x9] sm:$0x1]
        %v481 = vlaneseq
        %v482 = vshrl.u32 %v481, 7
        %v483 = vsub.s32 0, %v482
        %v484 = vrot.slane %v479, %v483
        %v485 = vmul.f32 %v265, %v484
        %v486 = vmul.f32 %v269, %v484
        %v487 = vmul.f32 %v273, %v484
        %v488 = vmul.f32 %v277, %v484
        %v489 = vmul.f32 %v281, %v484
        %v490 = vmul.f32 %v285, %v484
        %v491 = vmul.f32 %v289, %v484
        %v492 = vmul.f32 %v293, %v484
        %v493 = vadd.f32 %v226, %v485
        %v494 = vadd.f32 %v231, %v486
        %v495 = vadd.f32 %v236, %v487
        %v496 = vadd.f32 %v241, %v488
        %v497 = vadd.f32 %v246, %v489
        %v498 = vadd.f32 %v251, %v490
        %v499 = vadd.f32 %v256, %v491
        %v500 = vadd.f32 %v261, %v492
        %v501 = vmul.f32 %v493, 0.01
        %v502 = vmul.f32 %v494, 0.01
        %v503 = vmul.f32 %v495, 0.01
        %v504 = vmul.f32 %v496, 0.01
        %v505 = vmul.f32 %v497, 0.01
        %v506 = vmul.f32 %v498, 0.01
        %v507 = vmul.f32 %v499, 0.01
        %v508 = vmul.f32 %v500, 0.01
        %v509 = vmax.f32 %v493, %v501
        %v510 = vmax.f32 %v494, %v502
        %v511 = vmax.f32 %v495, %v503
        %v512 = vmax.f32 %v496, %v504
        %v513 = vmax.f32 %v497, %v505
        %v514 = vmax.f32 %v498, %v506
        %v515 = vmax.f32 %v499, %v507
        %v516 = vmax.f32 %v500, %v508
        %v517 = vmul.f32 %v297, %v509
        %v518 = vmul.f32 %v301, %v510
        %v519 = vmul.f32 %v305, %v511
        %v520 = vmul.f32 %v309, %v512
        %v521 = vadd.f32 %v517, %v518
        %v522 = vadd.f32 %v521, %v519
        %v523 = vadd.f32 %v522, %v520
        %v524 = vrot.slane %v523, 4
        %v525 = vadd.f32 %v523, %v524
        %v526 = vrot.slane %v525, 2
        %v527 = vadd.f32 %v525, %v526
        %v528 = vrot.slane %v527, 1
        %v529 = vadd.f32 %v527, %v528
        %v530 = vadd.f32 %v529, %v380
        %v531 = vmul.f32 %v313, %v513
        %v532 = vmul.f32 %v317, %v514
        %v533 = vmul.f32 %v321, %v515
        %v534 = vmul.f32 %v325, %v516
        %v535 = vadd.f32 %v531, %v532
        %v536 = vadd.f32 %v535, %v533
        %v537 = vadd.f32 %v536, %v534
        %v538 = vrot.slane %v537, 4
        %v539 = vadd.f32 %v537, %v538
        %v540 = vrot.slane %v539, 2
        %v541 = vadd.f32 %v539, %v540
        %v542 = vrot.slane %v541, 1
        %v543 = vadd.f32 %v541, %v542
        %v544 = vadd.f32 %v543, %v395
        %v545 = vmul.f32 %v530, 1.442695
        %v546 = vpow.pop %v545
        %v547 = vmul.f32 %v480, %v546
        %v548 = vadd.f32 %v547, %v544
        %549 = vst [vmem:[%s186 + $0x9] sm:$0x1] %v548
        %v550 = vld [vmem:[%s186 + $0xb] sm:$0x1]
        %v551 = vadd.f32 %v550, %v530
        %552 = vst [vmem:[%s186 + $0xb] sm:$0x1] %v551
        %v553 = vld [vmem:[%s186 + $0xc] sm:$0x1]
        %v554 = vld [vmem:[%s186 + $0xd] sm:$0x1]
        %v555 = vlaneseq
        %v556 = vshrl.u32 %v555, 7
        %v557 = vsub.s32 0, %v556
        %v558 = vrot.slane %v553, %v557
        %v559 = vmul.f32 %v265, %v558
        %v560 = vmul.f32 %v269, %v558
        %v561 = vmul.f32 %v273, %v558
        %v562 = vmul.f32 %v277, %v558
        %v563 = vmul.f32 %v281, %v558
        %v564 = vmul.f32 %v285, %v558
        %v565 = vmul.f32 %v289, %v558
        %v566 = vmul.f32 %v293, %v558
        %v567 = vadd.f32 %v226, %v559
        %v568 = vadd.f32 %v231, %v560
        %v569 = vadd.f32 %v236, %v561
        %v570 = vadd.f32 %v241, %v562
        %v571 = vadd.f32 %v246, %v563
        %v572 = vadd.f32 %v251, %v564
        %v573 = vadd.f32 %v256, %v565
        %v574 = vadd.f32 %v261, %v566
        %v575 = vmul.f32 %v567, 0.01
        %v576 = vmul.f32 %v568, 0.01
        %v577 = vmul.f32 %v569, 0.01
        %v578 = vmul.f32 %v570, 0.01
        %v579 = vmul.f32 %v571, 0.01
        %v580 = vmul.f32 %v572, 0.01
        %v581 = vmul.f32 %v573, 0.01
        %v582 = vmul.f32 %v574, 0.01
        %v583 = vmax.f32 %v567, %v575
        %v584 = vmax.f32 %v568, %v576
        %v585 = vmax.f32 %v569, %v577
        %v586 = vmax.f32 %v570, %v578
        %v587 = vmax.f32 %v571, %v579
        %v588 = vmax.f32 %v572, %v580
        %v589 = vmax.f32 %v573, %v581
        %v590 = vmax.f32 %v574, %v582
        %v591 = vmul.f32 %v297, %v583
        %v592 = vmul.f32 %v301, %v584
        %v593 = vmul.f32 %v305, %v585
        %v594 = vmul.f32 %v309, %v586
        %v595 = vadd.f32 %v591, %v592
        %v596 = vadd.f32 %v595, %v593
        %v597 = vadd.f32 %v596, %v594
        %v598 = vrot.slane %v597, 4
        %v599 = vadd.f32 %v597, %v598
        %v600 = vrot.slane %v599, 2
        %v601 = vadd.f32 %v599, %v600
        %v602 = vrot.slane %v601, 1
        %v603 = vadd.f32 %v601, %v602
        %v604 = vadd.f32 %v603, %v380
        %v605 = vmul.f32 %v313, %v587
        %v606 = vmul.f32 %v317, %v588
        %v607 = vmul.f32 %v321, %v589
        %v608 = vmul.f32 %v325, %v590
        %v609 = vadd.f32 %v605, %v606
        %v610 = vadd.f32 %v609, %v607
        %v611 = vadd.f32 %v610, %v608
        %v612 = vrot.slane %v611, 4
        %v613 = vadd.f32 %v611, %v612
        %v614 = vrot.slane %v613, 2
        %v615 = vadd.f32 %v613, %v614
        %v616 = vrot.slane %v615, 1
        %v617 = vadd.f32 %v615, %v616
        %v618 = vadd.f32 %v617, %v395
        %v619 = vmul.f32 %v604, 1.442695
        %v620 = vpow.pop %v619
        %v621 = vmul.f32 %v554, %v620
        %v622 = vadd.f32 %v621, %v618
        %623 = vst [vmem:[%s186 + $0xd] sm:$0x1] %v622
        %v624 = vld [vmem:[%s186 + $0xf] sm:$0x1]
        %v625 = vadd.f32 %v624, %v604
        %626 = vst [vmem:[%s186 + $0xf] sm:$0x1] %v625
        %s627 = scalar_lea.vmem %s1, 64
        %v628 = vld [vmem:[%s627] sm:$0xff]
        %v629 = vld [vmem:[%s627 + $0x8] sm:$0xff]
        %v630 = vld [vmem:[%s627 + $0x10] sm:$0xff]
        %v631 = vld [vmem:[%s627 + $0x18] sm:$0xff]
        %v632 = vld [vmem:[%s627 + $0x20] sm:$0xff]
        %v633 = vld [vmem:[%s627 + $0x28] sm:$0xff]
        %v634 = vld [vmem:[%s627 + $0x30] sm:$0xff]
        %v635 = vld [vmem:[%s627 + $0x38] sm:$0xff]
        %637 = vset.pattern.permute.xlu0 1
        %638 = vperm.xlu0 %637, %v628
        %v639 = vpop.permute.xlu0 %638
        %642 = vset.pattern.permute.xlu0 1
        %643 = vperm.xlu0 %642, %v629
        %v644 = vpop.permute.xlu0 %643
        %647 = vset.pattern.permute.xlu0 1
        %648 = vperm.xlu0 %647, %v630
        %v649 = vpop.permute.xlu0 %648
        %652 = vset.pattern.permute.xlu0 1
        %653 = vperm.xlu0 %652, %v631
        %v654 = vpop.permute.xlu0 %653
        %657 = vset.pattern.permute.xlu0 1
        %658 = vperm.xlu0 %657, %v632
        %v659 = vpop.permute.xlu0 %658
        %662 = vset.pattern.permute.xlu0 1
        %663 = vperm.xlu0 %662, %v633
        %v664 = vpop.permute.xlu0 %663
        %667 = vset.pattern.permute.xlu0 1
        %668 = vperm.xlu0 %667, %v634
        %v669 = vpop.permute.xlu0 %668
        %672 = vset.pattern.permute.xlu0 1
        %673 = vperm.xlu0 %672, %v635
        %v674 = vpop.permute.xlu0 %673
        %676 = vset.pattern.permute.xlu0 0
        %677 = vperm.xlu0 %676, %v628
        %v678 = vpop.permute.xlu0 %677
        %680 = vset.pattern.permute.xlu0 0
        %681 = vperm.xlu0 %680, %v629
        %v682 = vpop.permute.xlu0 %681
        %684 = vset.pattern.permute.xlu0 0
        %685 = vperm.xlu0 %684, %v630
        %v686 = vpop.permute.xlu0 %685
        %688 = vset.pattern.permute.xlu0 0
        %689 = vperm.xlu0 %688, %v631
        %v690 = vpop.permute.xlu0 %689
        %692 = vset.pattern.permute.xlu0 0
        %693 = vperm.xlu0 %692, %v632
        %v694 = vpop.permute.xlu0 %693
        %696 = vset.pattern.permute.xlu0 0
        %697 = vperm.xlu0 %696, %v633
        %v698 = vpop.permute.xlu0 %697
        %700 = vset.pattern.permute.xlu0 0
        %701 = vperm.xlu0 %700, %v634
        %v702 = vpop.permute.xlu0 %701
        %704 = vset.pattern.permute.xlu0 0
        %705 = vperm.xlu0 %704, %v635
        %v706 = vpop.permute.xlu0 %705
        %708 = vset.pattern.permute.xlu0 2
        %709 = vperm.xlu0 %708, %v628
        %v710 = vpop.permute.xlu0 %709
        %712 = vset.pattern.permute.xlu0 2
        %713 = vperm.xlu0 %712, %v629
        %v714 = vpop.permute.xlu0 %713
        %716 = vset.pattern.permute.xlu0 2
        %717 = vperm.xlu0 %716, %v630
        %v718 = vpop.permute.xlu0 %717
        %720 = vset.pattern.permute.xlu0 2
        %721 = vperm.xlu0 %720, %v631
        %v722 = vpop.permute.xlu0 %721
        %724 = vset.pattern.permute.xlu0 2
        %725 = vperm.xlu0 %724, %v632
        %v726 = vpop.permute.xlu0 %725
        %728 = vset.pattern.permute.xlu0 2
        %729 = vperm.xlu0 %728, %v633
        %v730 = vpop.permute.xlu0 %729
        %732 = vset.pattern.permute.xlu0 2
        %733 = vperm.xlu0 %732, %v634
        %v734 = vpop.permute.xlu0 %733
        %736 = vset.pattern.permute.xlu0 2
        %737 = vperm.xlu0 %736, %v635
        %v738 = vpop.permute.xlu0 %737
        %s740 = sld [smem:[#allocation2 + $0x2]]
        %s741 = sld [smem:[#allocation2 + $0x3]]
        %v742 = vld [vmem:[%s186 + $0x1] sm:$0x1]
        %v743 = vld [vmem:[%s186] sm:$0x1]
        %v744 = vlaneseq
        %v745 = vshrl.u32 %v744, 7
        %v746 = vsub.s32 0, %v745
        %v747 = vrot.slane %v742, %v746
        %v748 = vmul.f32 %v678, %v747
        %v749 = vmul.f32 %v682, %v747
        %v750 = vmul.f32 %v686, %v747
        %v751 = vmul.f32 %v690, %v747
        %v752 = vmul.f32 %v694, %v747
        %v753 = vmul.f32 %v698, %v747
        %v754 = vmul.f32 %v702, %v747
        %v755 = vmul.f32 %v706, %v747
        %v756 = vadd.f32 %v639, %v748
        %v757 = vadd.f32 %v644, %v749
        %v758 = vadd.f32 %v649, %v750
        %v759 = vadd.f32 %v654, %v751
        %v760 = vadd.f32 %v659, %v752
        %v761 = vadd.f32 %v664, %v753
        %v762 = vadd.f32 %v669, %v754
        %v763 = vadd.f32 %v674, %v755
        %v764 = vmul.f32 %v756, 0.01
        %v765 = vmul.f32 %v757, 0.01
        %v766 = vmul.f32 %v758, 0.01
        %v767 = vmul.f32 %v759, 0.01
        %v768 = vmul.f32 %v760, 0.01
        %v769 = vmul.f32 %v761, 0.01
        %v770 = vmul.f32 %v762, 0.01
        %v771 = vmul.f32 %v763, 0.01
        %v772 = vmax.f32 %v756, %v764
        %v773 = vmax.f32 %v757, %v765
        %v774 = vmax.f32 %v758, %v766
        %v775 = vmax.f32 %v759, %v767
        %v776 = vmax.f32 %v760, %v768
        %v777 = vmax.f32 %v761, %v769
        %v778 = vmax.f32 %v762, %v770
        %v779 = vmax.f32 %v763, %v771
        %v780 = vmul.f32 %v710, %v772
        %v781 = vmul.f32 %v714, %v773
        %v782 = vmul.f32 %v718, %v774
        %v783 = vmul.f32 %v722, %v775
        %v784 = vadd.f32 %v780, %v781
        %v785 = vadd.f32 %v784, %v782
        %v786 = vadd.f32 %v785, %v783
        %v787 = vrot.slane %v786, 4
        %v788 = vadd.f32 %v786, %v787
        %v789 = vrot.slane %v788, 2
        %v790 = vadd.f32 %v788, %v789
        %v791 = vrot.slane %v790, 1
        %v792 = vadd.f32 %v790, %v791
        %v793 = vstv %s740
        %v794 = vadd.f32 %v792, %v793
        %v795 = vmul.f32 %v726, %v776
        %v796 = vmul.f32 %v730, %v777
        %v797 = vmul.f32 %v734, %v778
        %v798 = vmul.f32 %v738, %v779
        %v799 = vadd.f32 %v795, %v796
        %v800 = vadd.f32 %v799, %v797
        %v801 = vadd.f32 %v800, %v798
        %v802 = vrot.slane %v801, 4
        %v803 = vadd.f32 %v801, %v802
        %v804 = vrot.slane %v803, 2
        %v805 = vadd.f32 %v803, %v804
        %v806 = vrot.slane %v805, 1
        %v807 = vadd.f32 %v805, %v806
        %v808 = vstv %s741
        %v809 = vadd.f32 %v807, %v808
        %v810 = vmul.f32 %v794, 1.442695
        %v811 = vpow.pop %v810
        %v812 = vmul.f32 %v743, %v811
        %v813 = vadd.f32 %v812, %v809
        %814 = vst [vmem:[%s186] sm:$0x1] %v813
        %v815 = vld [vmem:[%s186 + $0x3] sm:$0x1]
        %v816 = vadd.f32 %v815, %v794
        %817 = vst [vmem:[%s186 + $0x3] sm:$0x1] %v816
        %v818 = vld [vmem:[%s186 + $0x5] sm:$0x1]
        %v819 = vld [vmem:[%s186 + $0x4] sm:$0x1]
        %v820 = vlaneseq
        %v821 = vshrl.u32 %v820, 7
        %v822 = vsub.s32 0, %v821
        %v823 = vrot.slane %v818, %v822
        %v824 = vmul.f32 %v678, %v823
        %v825 = vmul.f32 %v682, %v823
        %v826 = vmul.f32 %v686, %v823
        %v827 = vmul.f32 %v690, %v823
        %v828 = vmul.f32 %v694, %v823
        %v829 = vmul.f32 %v698, %v823
        %v830 = vmul.f32 %v702, %v823
        %v831 = vmul.f32 %v706, %v823
        %v832 = vadd.f32 %v639, %v824
        %v833 = vadd.f32 %v644, %v825
        %v834 = vadd.f32 %v649, %v826
        %v835 = vadd.f32 %v654, %v827
        %v836 = vadd.f32 %v659, %v828
        %v837 = vadd.f32 %v664, %v829
        %v838 = vadd.f32 %v669, %v830
        %v839 = vadd.f32 %v674, %v831
        %v840 = vmul.f32 %v832, 0.01
        %v841 = vmul.f32 %v833, 0.01
        %v842 = vmul.f32 %v834, 0.01
        %v843 = vmul.f32 %v835, 0.01
        %v844 = vmul.f32 %v836, 0.01
        %v845 = vmul.f32 %v837, 0.01
        %v846 = vmul.f32 %v838, 0.01
        %v847 = vmul.f32 %v839, 0.01
        %v848 = vmax.f32 %v832, %v840
        %v849 = vmax.f32 %v833, %v841
        %v850 = vmax.f32 %v834, %v842
        %v851 = vmax.f32 %v835, %v843
        %v852 = vmax.f32 %v836, %v844
        %v853 = vmax.f32 %v837, %v845
        %v854 = vmax.f32 %v838, %v846
        %v855 = vmax.f32 %v839, %v847
        %v856 = vmul.f32 %v710, %v848
        %v857 = vmul.f32 %v714, %v849
        %v858 = vmul.f32 %v718, %v850
        %v859 = vmul.f32 %v722, %v851
        %v860 = vadd.f32 %v856, %v857
        %v861 = vadd.f32 %v860, %v858
        %v862 = vadd.f32 %v861, %v859
        %v863 = vrot.slane %v862, 4
        %v864 = vadd.f32 %v862, %v863
        %v865 = vrot.slane %v864, 2
        %v866 = vadd.f32 %v864, %v865
        %v867 = vrot.slane %v866, 1
        %v868 = vadd.f32 %v866, %v867
        %v869 = vadd.f32 %v868, %v793
        %v870 = vmul.f32 %v726, %v852
        %v871 = vmul.f32 %v730, %v853
        %v872 = vmul.f32 %v734, %v854
        %v873 = vmul.f32 %v738, %v855
        %v874 = vadd.f32 %v870, %v871
        %v875 = vadd.f32 %v874, %v872
        %v876 = vadd.f32 %v875, %v873
        %v877 = vrot.slane %v876, 4
        %v878 = vadd.f32 %v876, %v877
        %v879 = vrot.slane %v878, 2
        %v880 = vadd.f32 %v878, %v879
        %v881 = vrot.slane %v880, 1
        %v882 = vadd.f32 %v880, %v881
        %v883 = vadd.f32 %v882, %v808
        %v884 = vmul.f32 %v869, 1.442695
        %v885 = vpow.pop %v884
        %v886 = vmul.f32 %v819, %v885
        %v887 = vadd.f32 %v886, %v883
        %888 = vst [vmem:[%s186 + $0x4] sm:$0x1] %v887
        %v889 = vld [vmem:[%s186 + $0x7] sm:$0x1]
        %v890 = vadd.f32 %v889, %v869
        %891 = vst [vmem:[%s186 + $0x7] sm:$0x1] %v890
        %v892 = vld [vmem:[%s186 + $0x9] sm:$0x1]
        %v893 = vld [vmem:[%s186 + $0x8] sm:$0x1]
        %v894 = vlaneseq
        %v895 = vshrl.u32 %v894, 7
        %v896 = vsub.s32 0, %v895
        %v897 = vrot.slane %v892, %v896
        %v898 = vmul.f32 %v678, %v897
        %v899 = vmul.f32 %v682, %v897
        %v900 = vmul.f32 %v686, %v897
        %v901 = vmul.f32 %v690, %v897
        %v902 = vmul.f32 %v694, %v897
        %v903 = vmul.f32 %v698, %v897
        %v904 = vmul.f32 %v702, %v897
        %v905 = vmul.f32 %v706, %v897
        %v906 = vadd.f32 %v639, %v898
        %v907 = vadd.f32 %v644, %v899
        %v908 = vadd.f32 %v649, %v900
        %v909 = vadd.f32 %v654, %v901
        %v910 = vadd.f32 %v659, %v902
        %v911 = vadd.f32 %v664, %v903
        %v912 = vadd.f32 %v669, %v904
        %v913 = vadd.f32 %v674, %v905
        %v914 = vmul.f32 %v906, 0.01
        %v915 = vmul.f32 %v907, 0.01
        %v916 = vmul.f32 %v908, 0.01
        %v917 = vmul.f32 %v909, 0.01
        %v918 = vmul.f32 %v910, 0.01
        %v919 = vmul.f32 %v911, 0.01
        %v920 = vmul.f32 %v912, 0.01
        %v921 = vmul.f32 %v913, 0.01
        %v922 = vmax.f32 %v906, %v914
        %v923 = vmax.f32 %v907, %v915
        %v924 = vmax.f32 %v908, %v916
        %v925 = vmax.f32 %v909, %v917
        %v926 = vmax.f32 %v910, %v918
        %v927 = vmax.f32 %v911, %v919
        %v928 = vmax.f32 %v912, %v920
        %v929 = vmax.f32 %v913, %v921
        %v930 = vmul.f32 %v710, %v922
        %v931 = vmul.f32 %v714, %v923
        %v932 = vmul.f32 %v718, %v924
        %v933 = vmul.f32 %v722, %v925
        %v934 = vadd.f32 %v930, %v931
        %v935 = vadd.f32 %v934, %v932
        %v936 = vadd.f32 %v935, %v933
        %v937 = vrot.slane %v936, 4
        %v938 = vadd.f32 %v936, %v937
        %v939 = vrot.slane %v938, 2
        %v940 = vadd.f32 %v938, %v939
        %v941 = vrot.slane %v940, 1
        %v942 = vadd.f32 %v940, %v941
        %v943 = vadd.f32 %v942, %v793
        %v944 = vmul.f32 %v726, %v926
        %v945 = vmul.f32 %v730, %v927
        %v946 = vmul.f32 %v734, %v928
        %v947 = vmul.f32 %v738, %v929
        %v948 = vadd.f32 %v944, %v945
        %v949 = vadd.f32 %v948, %v946
        %v950 = vadd.f32 %v949, %v947
        %v951 = vrot.slane %v950, 4
        %v952 = vadd.f32 %v950, %v951
        %v953 = vrot.slane %v952, 2
        %v954 = vadd.f32 %v952, %v953
        %v955 = vrot.slane %v954, 1
        %v956 = vadd.f32 %v954, %v955
        %v957 = vadd.f32 %v956, %v808
        %v958 = vmul.f32 %v943, 1.442695
        %v959 = vpow.pop %v958
        %v960 = vmul.f32 %v893, %v959
        %v961 = vadd.f32 %v960, %v957
        %962 = vst [vmem:[%s186 + $0x8] sm:$0x1] %v961
        %v963 = vld [vmem:[%s186 + $0xb] sm:$0x1]
        %v964 = vadd.f32 %v963, %v943
        %965 = vst [vmem:[%s186 + $0xb] sm:$0x1] %v964
        %v966 = vld [vmem:[%s186 + $0xd] sm:$0x1]
        %v967 = vld [vmem:[%s186 + $0xc] sm:$0x1]
        %v968 = vlaneseq
        %v969 = vshrl.u32 %v968, 7
        %v970 = vsub.s32 0, %v969
        %v971 = vrot.slane %v966, %v970
        %v972 = vmul.f32 %v678, %v971
        %v973 = vmul.f32 %v682, %v971
        %v974 = vmul.f32 %v686, %v971
        %v975 = vmul.f32 %v690, %v971
        %v976 = vmul.f32 %v694, %v971
        %v977 = vmul.f32 %v698, %v971
        %v978 = vmul.f32 %v702, %v971
        %v979 = vmul.f32 %v706, %v971
        %v980 = vadd.f32 %v639, %v972
        %v981 = vadd.f32 %v644, %v973
        %v982 = vadd.f32 %v649, %v974
        %v983 = vadd.f32 %v654, %v975
        %v984 = vadd.f32 %v659, %v976
        %v985 = vadd.f32 %v664, %v977
        %v986 = vadd.f32 %v669, %v978
        %v987 = vadd.f32 %v674, %v979
        %v988 = vmul.f32 %v980, 0.01
        %v989 = vmul.f32 %v981, 0.01
        %v990 = vmul.f32 %v982, 0.01
        %v991 = vmul.f32 %v983, 0.01
        %v992 = vmul.f32 %v984, 0.01
        %v993 = vmul.f32 %v985, 0.01
        %v994 = vmul.f32 %v986, 0.01
        %v995 = vmul.f32 %v987, 0.01
        %v996 = vmax.f32 %v980, %v988
        %v997 = vmax.f32 %v981, %v989
        %v998 = vmax.f32 %v982, %v990
        %v999 = vmax.f32 %v983, %v991
        %v1000 = vmax.f32 %v984, %v992
        %v1001 = vmax.f32 %v985, %v993
        %v1002 = vmax.f32 %v986, %v994
        %v1003 = vmax.f32 %v987, %v995
        %v1004 = vmul.f32 %v710, %v996
        %v1005 = vmul.f32 %v714, %v997
        %v1006 = vmul.f32 %v718, %v998
        %v1007 = vmul.f32 %v722, %v999
        %v1008 = vadd.f32 %v1004, %v1005
        %v1009 = vadd.f32 %v1008, %v1006
        %v1010 = vadd.f32 %v1009, %v1007
        %v1011 = vrot.slane %v1010, 4
        %v1012 = vadd.f32 %v1010, %v1011
        %v1013 = vrot.slane %v1012, 2
        %v1014 = vadd.f32 %v1012, %v1013
        %v1015 = vrot.slane %v1014, 1
        %v1016 = vadd.f32 %v1014, %v1015
        %v1017 = vadd.f32 %v1016, %v793
        %v1018 = vmul.f32 %v726, %v1000
        %v1019 = vmul.f32 %v730, %v1001
        %v1020 = vmul.f32 %v734, %v1002
        %v1021 = vmul.f32 %v738, %v1003
        %v1022 = vadd.f32 %v1018, %v1019
        %v1023 = vadd.f32 %v1022, %v1020
        %v1024 = vadd.f32 %v1023, %v1021
        %v1025 = vrot.slane %v1024, 4
        %v1026 = vadd.f32 %v1024, %v1025
        %v1027 = vrot.slane %v1026, 2
        %v1028 = vadd.f32 %v1026, %v1027
        %v1029 = vrot.slane %v1028, 1
        %v1030 = vadd.f32 %v1028, %v1029
        %v1031 = vadd.f32 %v1030, %v808
        %v1032 = vmul.f32 %v1017, 1.442695
        %v1033 = vpow.pop %v1032
        %v1034 = vmul.f32 %v967, %v1033
        %v1035 = vadd.f32 %v1034, %v1031
        %1036 = vst [vmem:[%s186 + $0xc] sm:$0x1] %v1035
        %v1037 = vld [vmem:[%s186 + $0xf] sm:$0x1]
        %v1038 = vadd.f32 %v1037, %v1017
        %1039 = vst [vmem:[%s186 + $0xf] sm:$0x1] %v1038
        %s1040 = scalar_lea.vmem %s1, 128
        %v1041 = vld [vmem:[%s1040] sm:$0xff]
        %v1042 = vld [vmem:[%s1040 + $0x8] sm:$0xff]
        %v1043 = vld [vmem:[%s1040 + $0x10] sm:$0xff]
        %v1044 = vld [vmem:[%s1040 + $0x18] sm:$0xff]
        %v1045 = vld [vmem:[%s1040 + $0x20] sm:$0xff]
        %v1046 = vld [vmem:[%s1040 + $0x28] sm:$0xff]
        %v1047 = vld [vmem:[%s1040 + $0x30] sm:$0xff]
        %v1048 = vld [vmem:[%s1040 + $0x38] sm:$0xff]
        %1050 = vset.pattern.permute.xlu0 1
        %1051 = vperm.xlu0 %1050, %v1041
        %v1052 = vpop.permute.xlu0 %1051
        %1055 = vset.pattern.permute.xlu0 1
        %1056 = vperm.xlu0 %1055, %v1042
        %v1057 = vpop.permute.xlu0 %1056
        %1060 = vset.pattern.permute.xlu0 1
        %1061 = vperm.xlu0 %1060, %v1043
        %v1062 = vpop.permute.xlu0 %1061
        %1065 = vset.pattern.permute.xlu0 1
        %1066 = vperm.xlu0 %1065, %v1044
        %v1067 = vpop.permute.xlu0 %1066
        %1070 = vset.pattern.permute.xlu0 1
        %1071 = vperm.xlu0 %1070, %v1045
        %v1072 = vpop.permute.xlu0 %1071
        %1075 = vset.pattern.permute.xlu0 1
        %1076 = vperm.xlu0 %1075, %v1046
        %v1077 = vpop.permute.xlu0 %1076
        %1080 = vset.pattern.permute.xlu0 1
        %1081 = vperm.xlu0 %1080, %v1047
        %v1082 = vpop.permute.xlu0 %1081
        %1085 = vset.pattern.permute.xlu0 1
        %1086 = vperm.xlu0 %1085, %v1048
        %v1087 = vpop.permute.xlu0 %1086
        %1089 = vset.pattern.permute.xlu0 0
        %1090 = vperm.xlu0 %1089, %v1041
        %v1091 = vpop.permute.xlu0 %1090
        %1093 = vset.pattern.permute.xlu0 0
        %1094 = vperm.xlu0 %1093, %v1042
        %v1095 = vpop.permute.xlu0 %1094
        %1097 = vset.pattern.permute.xlu0 0
        %1098 = vperm.xlu0 %1097, %v1043
        %v1099 = vpop.permute.xlu0 %1098
        %1101 = vset.pattern.permute.xlu0 0
        %1102 = vperm.xlu0 %1101, %v1044
        %v1103 = vpop.permute.xlu0 %1102
        %1105 = vset.pattern.permute.xlu0 0
        %1106 = vperm.xlu0 %1105, %v1045
        %v1107 = vpop.permute.xlu0 %1106
        %1109 = vset.pattern.permute.xlu0 0
        %1110 = vperm.xlu0 %1109, %v1046
        %v1111 = vpop.permute.xlu0 %1110
        %1113 = vset.pattern.permute.xlu0 0
        %1114 = vperm.xlu0 %1113, %v1047
        %v1115 = vpop.permute.xlu0 %1114
        %1117 = vset.pattern.permute.xlu0 0
        %1118 = vperm.xlu0 %1117, %v1048
        %v1119 = vpop.permute.xlu0 %1118
        %1121 = vset.pattern.permute.xlu0 2
        %1122 = vperm.xlu0 %1121, %v1041
        %v1123 = vpop.permute.xlu0 %1122
        %1125 = vset.pattern.permute.xlu0 2
        %1126 = vperm.xlu0 %1125, %v1042
        %v1127 = vpop.permute.xlu0 %1126
        %1129 = vset.pattern.permute.xlu0 2
        %1130 = vperm.xlu0 %1129, %v1043
        %v1131 = vpop.permute.xlu0 %1130
        %1133 = vset.pattern.permute.xlu0 2
        %1134 = vperm.xlu0 %1133, %v1044
        %v1135 = vpop.permute.xlu0 %1134
        %1137 = vset.pattern.permute.xlu0 2
        %1138 = vperm.xlu0 %1137, %v1045
        %v1139 = vpop.permute.xlu0 %1138
        %1141 = vset.pattern.permute.xlu0 2
        %1142 = vperm.xlu0 %1141, %v1046
        %v1143 = vpop.permute.xlu0 %1142
        %1145 = vset.pattern.permute.xlu0 2
        %1146 = vperm.xlu0 %1145, %v1047
        %v1147 = vpop.permute.xlu0 %1146
        %1149 = vset.pattern.permute.xlu0 2
        %1150 = vperm.xlu0 %1149, %v1048
        %v1151 = vpop.permute.xlu0 %1150
        %s1153 = sld [smem:[#allocation2 + $0x4]]
        %s1154 = sld [smem:[#allocation2 + $0x5]]
        %v1155 = vld [vmem:[%s186] sm:$0x1]
        %v1156 = vld [vmem:[%s186 + $0x1] sm:$0x1]
        %v1157 = vlaneseq
        %v1158 = vshrl.u32 %v1157, 7
        %v1159 = vsub.s32 0, %v1158
        %v1160 = vrot.slane %v1155, %v1159
        %v1161 = vmul.f32 %v1091, %v1160
        %v1162 = vmul.f32 %v1095, %v1160
        %v1163 = vmul.f32 %v1099, %v1160
        %v1164 = vmul.f32 %v1103, %v1160
        %v1165 = vmul.f32 %v1107, %v1160
        %v1166 = vmul.f32 %v1111, %v1160
        %v1167 = vmul.f32 %v1115, %v1160
        %v1168 = vmul.f32 %v1119, %v1160
        %v1169 = vadd.f32 %v1052, %v1161
        %v1170 = vadd.f32 %v1057, %v1162
        %v1171 = vadd.f32 %v1062, %v1163
        %v1172 = vadd.f32 %v1067, %v1164
        %v1173 = vadd.f32 %v1072, %v1165
        %v1174 = vadd.f32 %v1077, %v1166
        %v1175 = vadd.f32 %v1082, %v1167
        %v1176 = vadd.f32 %v1087, %v1168
        %v1177 = vmul.f32 %v1169, 0.01
        %v1178 = vmul.f32 %v1170, 0.01
        %v1179 = vmul.f32 %v1171, 0.01
        %v1180 = vmul.f32 %v1172, 0.01
        %v1181 = vmul.f32 %v1173, 0.01
        %v1182 = vmul.f32 %v1174, 0.01
        %v1183 = vmul.f32 %v1175, 0.01
        %v1184 = vmul.f32 %v1176, 0.01
        %v1185 = vmax.f32 %v1169, %v1177
        %v1186 = vmax.f32 %v1170, %v1178
        %v1187 = vmax.f32 %v1171, %v1179
        %v1188 = vmax.f32 %v1172, %v1180
        %v1189 = vmax.f32 %v1173, %v1181
        %v1190 = vmax.f32 %v1174, %v1182
        %v1191 = vmax.f32 %v1175, %v1183
        %v1192 = vmax.f32 %v1176, %v1184
        %v1193 = vmul.f32 %v1123, %v1185
        %v1194 = vmul.f32 %v1127, %v1186
        %v1195 = vmul.f32 %v1131, %v1187
        %v1196 = vmul.f32 %v1135, %v1188
        %v1197 = vadd.f32 %v1193, %v1194
        %v1198 = vadd.f32 %v1197, %v1195
        %v1199 = vadd.f32 %v1198, %v1196
        %v1200 = vrot.slane %v1199, 4
        %v1201 = vadd.f32 %v1199, %v1200
        %v1202 = vrot.slane %v1201, 2
        %v1203 = vadd.f32 %v1201, %v1202
        %v1204 = vrot.slane %v1203, 1
        %v1205 = vadd.f32 %v1203, %v1204
        %v1206 = vstv %s1153
        %v1207 = vadd.f32 %v1205, %v1206
        %v1208 = vmul.f32 %v1139, %v1189
        %v1209 = vmul.f32 %v1143, %v1190
        %v1210 = vmul.f32 %v1147, %v1191
        %v1211 = vmul.f32 %v1151, %v1192
        %v1212 = vadd.f32 %v1208, %v1209
        %v1213 = vadd.f32 %v1212, %v1210
        %v1214 = vadd.f32 %v1213, %v1211
        %v1215 = vrot.slane %v1214, 4
        %v1216 = vadd.f32 %v1214, %v1215
        %v1217 = vrot.slane %v1216, 2
        %v1218 = vadd.f32 %v1216, %v1217
        %v1219 = vrot.slane %v1218, 1
        %v1220 = vadd.f32 %v1218, %v1219
        %v1221 = vstv %s1154
        %v1222 = vadd.f32 %v1220, %v1221
        %v1223 = vmul.f32 %v1207, 1.442695
        %v1224 = vpow.pop %v1223
        %v1225 = vmul.f32 %v1156, %v1224
        %v1226 = vadd.f32 %v1225, %v1222
        %1227 = vst [vmem:[%s186 + $0x1] sm:$0x1] %v1226
        %v1228 = vld [vmem:[%s186 + $0x3] sm:$0x1]
        %v1229 = vadd.f32 %v1228, %v1207
        %1230 = vst [vmem:[%s186 + $0x3] sm:$0x1] %v1229
        %v1231 = vld [vmem:[%s186 + $0x4] sm:$0x1]
        %v1232 = vld [vmem:[%s186 + $0x5] sm:$0x1]
        %v1233 = vlaneseq
        %v1234 = vshrl.u32 %v1233, 7
        %v1235 = vsub.s32 0, %v1234
        %v1236 = vrot.slane %v1231, %v1235
        %v1237 = vmul.f32 %v1091, %v1236
        %v1238 = vmul.f32 %v1095, %v1236
        %v1239 = vmul.f32 %v1099, %v1236
        %v1240 = vmul.f32 %v1103, %v1236
        %v1241 = vmul.f32 %v1107, %v1236
        %v1242 = vmul.f32 %v1111, %v1236
        %v1243 = vmul.f32 %v1115, %v1236
        %v1244 = vmul.f32 %v1119, %v1236
        %v1245 = vadd.f32 %v1052, %v1237
        %v1246 = vadd.f32 %v1057, %v1238
        %v1247 = vadd.f32 %v1062, %v1239
        %v1248 = vadd.f32 %v1067, %v1240
        %v1249 = vadd.f32 %v1072, %v1241
        %v1250 = vadd.f32 %v1077, %v1242
        %v1251 = vadd.f32 %v1082, %v1243
        %v1252 = vadd.f32 %v1087, %v1244
        %v1253 = vmul.f32 %v1245, 0.01
        %v1254 = vmul.f32 %v1246, 0.01
        %v1255 = vmul.f32 %v1247, 0.01
        %v1256 = vmul.f32 %v1248, 0.01
        %v1257 = vmul.f32 %v1249, 0.01
        %v1258 = vmul.f32 %v1250, 0.01
        %v1259 = vmul.f32 %v1251, 0.01
        %v1260 = vmul.f32 %v1252, 0.01
        %v1261 = vmax.f32 %v1245, %v1253
        %v1262 = vmax.f32 %v1246, %v1254
        %v1263 = vmax.f32 %v1247, %v1255
        %v1264 = vmax.f32 %v1248, %v1256
        %v1265 = vmax.f32 %v1249, %v1257
        %v1266 = vmax.f32 %v1250, %v1258
        %v1267 = vmax.f32 %v1251, %v1259
        %v1268 = vmax.f32 %v1252, %v1260
        %v1269 = vmul.f32 %v1123, %v1261
        %v1270 = vmul.f32 %v1127, %v1262
        %v1271 = vmul.f32 %v1131, %v1263
        %v1272 = vmul.f32 %v1135, %v1264
        %v1273 = vadd.f32 %v1269, %v1270
        %v1274 = vadd.f32 %v1273, %v1271
        %v1275 = vadd.f32 %v1274, %v1272
        %v1276 = vrot.slane %v1275, 4
        %v1277 = vadd.f32 %v1275, %v1276
        %v1278 = vrot.slane %v1277, 2
        %v1279 = vadd.f32 %v1277, %v1278
        %v1280 = vrot.slane %v1279, 1
        %v1281 = vadd.f32 %v1279, %v1280
        %v1282 = vadd.f32 %v1281, %v1206
        %v1283 = vmul.f32 %v1139, %v1265
        %v1284 = vmul.f32 %v1143, %v1266
        %v1285 = vmul.f32 %v1147, %v1267
        %v1286 = vmul.f32 %v1151, %v1268
        %v1287 = vadd.f32 %v1283, %v1284
        %v1288 = vadd.f32 %v1287, %v1285
        %v1289 = vadd.f32 %v1288, %v1286
        %v1290 = vrot.slane %v1289, 4
        %v1291 = vadd.f32 %v1289, %v1290
        %v1292 = vrot.slane %v1291, 2
        %v1293 = vadd.f32 %v1291, %v1292
        %v1294 = vrot.slane %v1293, 1
        %v1295 = vadd.f32 %v1293, %v1294
        %v1296 = vadd.f32 %v1295, %v1221
        %v1297 = vmul.f32 %v1282, 1.442695
        %v1298 = vpow.pop %v1297
        %v1299 = vmul.f32 %v1232, %v1298
        %v1300 = vadd.f32 %v1299, %v1296
        %1301 = vst [vmem:[%s186 + $0x5] sm:$0x1] %v1300
        %v1302 = vld [vmem:[%s186 + $0x7] sm:$0x1]
        %v1303 = vadd.f32 %v1302, %v1282
        %1304 = vst [vmem:[%s186 + $0x7] sm:$0x1] %v1303
        %v1305 = vld [vmem:[%s186 + $0x8] sm:$0x1]
        %v1306 = vld [vmem:[%s186 + $0x9] sm:$0x1]
        %v1307 = vlaneseq
        %v1308 = vshrl.u32 %v1307, 7
        %v1309 = vsub.s32 0, %v1308
        %v1310 = vrot.slane %v1305, %v1309
        %v1311 = vmul.f32 %v1091, %v1310
        %v1312 = vmul.f32 %v1095, %v1310
        %v1313 = vmul.f32 %v1099, %v1310
        %v1314 = vmul.f32 %v1103, %v1310
        %v1315 = vmul.f32 %v1107, %v1310
        %v1316 = vmul.f32 %v1111, %v1310
        %v1317 = vmul.f32 %v1115, %v1310
        %v1318 = vmul.f32 %v1119, %v1310
        %v1319 = vadd.f32 %v1052, %v1311
        %v1320 = vadd.f32 %v1057, %v1312
        %v1321 = vadd.f32 %v1062, %v1313
        %v1322 = vadd.f32 %v1067, %v1314
        %v1323 = vadd.f32 %v1072, %v1315
        %v1324 = vadd.f32 %v1077, %v1316
        %v1325 = vadd.f32 %v1082, %v1317
        %v1326 = vadd.f32 %v1087, %v1318
        %v1327 = vmul.f32 %v1319, 0.01
        %v1328 = vmul.f32 %v1320, 0.01
        %v1329 = vmul.f32 %v1321, 0.01
        %v1330 = vmul.f32 %v1322, 0.01
        %v1331 = vmul.f32 %v1323, 0.01
        %v1332 = vmul.f32 %v1324, 0.01
        %v1333 = vmul.f32 %v1325, 0.01
        %v1334 = vmul.f32 %v1326, 0.01
        %v1335 = vmax.f32 %v1319, %v1327
        %v1336 = vmax.f32 %v1320, %v1328
        %v1337 = vmax.f32 %v1321, %v1329
        %v1338 = vmax.f32 %v1322, %v1330
        %v1339 = vmax.f32 %v1323, %v1331
        %v1340 = vmax.f32 %v1324, %v1332
        %v1341 = vmax.f32 %v1325, %v1333
        %v1342 = vmax.f32 %v1326, %v1334
        %v1343 = vmul.f32 %v1123, %v1335
        %v1344 = vmul.f32 %v1127, %v1336
        %v1345 = vmul.f32 %v1131, %v1337
        %v1346 = vmul.f32 %v1135, %v1338
        %v1347 = vadd.f32 %v1343, %v1344
        %v1348 = vadd.f32 %v1347, %v1345
        %v1349 = vadd.f32 %v1348, %v1346
        %v1350 = vrot.slane %v1349, 4
        %v1351 = vadd.f32 %v1349, %v1350
        %v1352 = vrot.slane %v1351, 2
        %v1353 = vadd.f32 %v1351, %v1352
        %v1354 = vrot.slane %v1353, 1
        %v1355 = vadd.f32 %v1353, %v1354
        %v1356 = vadd.f32 %v1355, %v1206
        %v1357 = vmul.f32 %v1139, %v1339
        %v1358 = vmul.f32 %v1143, %v1340
        %v1359 = vmul.f32 %v1147, %v1341
        %v1360 = vmul.f32 %v1151, %v1342
        %v1361 = vadd.f32 %v1357, %v1358
        %v1362 = vadd.f32 %v1361, %v1359
        %v1363 = vadd.f32 %v1362, %v1360
        %v1364 = vrot.slane %v1363, 4
        %v1365 = vadd.f32 %v1363, %v1364
        %v1366 = vrot.slane %v1365, 2
        %v1367 = vadd.f32 %v1365, %v1366
        %v1368 = vrot.slane %v1367, 1
        %v1369 = vadd.f32 %v1367, %v1368
        %v1370 = vadd.f32 %v1369, %v1221
        %v1371 = vmul.f32 %v1356, 1.442695
        %v1372 = vpow.pop %v1371
        %v1373 = vmul.f32 %v1306, %v1372
        %v1374 = vadd.f32 %v1373, %v1370
        %1375 = vst [vmem:[%s186 + $0x9] sm:$0x1] %v1374
        %v1376 = vld [vmem:[%s186 + $0xb] sm:$0x1]
        %v1377 = vadd.f32 %v1376, %v1356
        %1378 = vst [vmem:[%s186 + $0xb] sm:$0x1] %v1377
        %v1379 = vld [vmem:[%s186 + $0xc] sm:$0x1]
        %v1380 = vld [vmem:[%s186 + $0xd] sm:$0x1]
        %v1381 = vlaneseq
        %v1382 = vshrl.u32 %v1381, 7
        %v1383 = vsub.s32 0, %v1382
        %v1384 = vrot.slane %v1379, %v1383
        %v1385 = vmul.f32 %v1091, %v1384
        %v1386 = vmul.f32 %v1095, %v1384
        %v1387 = vmul.f32 %v1099, %v1384
        %v1388 = vmul.f32 %v1103, %v1384
        %v1389 = vmul.f32 %v1107, %v1384
        %v1390 = vmul.f32 %v1111, %v1384
        %v1391 = vmul.f32 %v1115, %v1384
        %v1392 = vmul.f32 %v1119, %v1384
        %v1393 = vadd.f32 %v1052, %v1385
        %v1394 = vadd.f32 %v1057, %v1386
        %v1395 = vadd.f32 %v1062, %v1387
        %v1396 = vadd.f32 %v1067, %v1388
        %v1397 = vadd.f32 %v1072, %v1389
        %v1398 = vadd.f32 %v1077, %v1390
        %v1399 = vadd.f32 %v1082, %v1391
        %v1400 = vadd.f32 %v1087, %v1392
        %v1401 = vmul.f32 %v1393, 0.01
        %v1402 = vmul.f32 %v1394, 0.01
        %v1403 = vmul.f32 %v1395, 0.01
        %v1404 = vmul.f32 %v1396, 0.01
        %v1405 = vmul.f32 %v1397, 0.01
        %v1406 = vmul.f32 %v1398, 0.01
        %v1407 = vmul.f32 %v1399, 0.01
        %v1408 = vmul.f32 %v1400, 0.01
        %v1409 = vmax.f32 %v1393, %v1401
        %v1410 = vmax.f32 %v1394, %v1402
        %v1411 = vmax.f32 %v1395, %v1403
        %v1412 = vmax.f32 %v1396, %v1404
        %v1413 = vmax.f32 %v1397, %v1405
        %v1414 = vmax.f32 %v1398, %v1406
        %v1415 = vmax.f32 %v1399, %v1407
        %v1416 = vmax.f32 %v1400, %v1408
        %v1417 = vmul.f32 %v1123, %v1409
        %v1418 = vmul.f32 %v1127, %v1410
        %v1419 = vmul.f32 %v1131, %v1411
        %v1420 = vmul.f32 %v1135, %v1412
        %v1421 = vadd.f32 %v1417, %v1418
        %v1422 = vadd.f32 %v1421, %v1419
        %v1423 = vadd.f32 %v1422, %v1420
        %v1424 = vrot.slane %v1423, 4
        %v1425 = vadd.f32 %v1423, %v1424
        %v1426 = vrot.slane %v1425, 2
        %v1427 = vadd.f32 %v1425, %v1426
        %v1428 = vrot.slane %v1427, 1
        %v1429 = vadd.f32 %v1427, %v1428
        %v1430 = vadd.f32 %v1429, %v1206
        %v1431 = vmul.f32 %v1139, %v1413
        %v1432 = vmul.f32 %v1143, %v1414
        %v1433 = vmul.f32 %v1147, %v1415
        %v1434 = vmul.f32 %v1151, %v1416
        %v1435 = vadd.f32 %v1431, %v1432
        %v1436 = vadd.f32 %v1435, %v1433
        %v1437 = vadd.f32 %v1436, %v1434
        %v1438 = vrot.slane %v1437, 4
        %v1439 = vadd.f32 %v1437, %v1438
        %v1440 = vrot.slane %v1439, 2
        %v1441 = vadd.f32 %v1439, %v1440
        %v1442 = vrot.slane %v1441, 1
        %v1443 = vadd.f32 %v1441, %v1442
        %v1444 = vadd.f32 %v1443, %v1221
        %v1445 = vmul.f32 %v1430, 1.442695
        %v1446 = vpow.pop %v1445
        %v1447 = vmul.f32 %v1380, %v1446
        %v1448 = vadd.f32 %v1447, %v1444
        %1449 = vst [vmem:[%s186 + $0xd] sm:$0x1] %v1448
        %v1450 = vld [vmem:[%s186 + $0xf] sm:$0x1]
        %v1451 = vadd.f32 %v1450, %v1430
        %1452 = vst [vmem:[%s186 + $0xf] sm:$0x1] %v1451
        %s1453 = scalar_lea.vmem %s1, 192
        %v1454 = vld [vmem:[%s1453] sm:$0xff]
        %v1455 = vld [vmem:[%s1453 + $0x8] sm:$0xff]
        %v1456 = vld [vmem:[%s1453 + $0x10] sm:$0xff]
        %v1457 = vld [vmem:[%s1453 + $0x18] sm:$0xff]
        %v1458 = vld [vmem:[%s1453 + $0x20] sm:$0xff]
        %v1459 = vld [vmem:[%s1453 + $0x28] sm:$0xff]
        %v1460 = vld [vmem:[%s1453 + $0x30] sm:$0xff]
        %v1461 = vld [vmem:[%s1453 + $0x38] sm:$0xff]
        %1463 = vset.pattern.permute.xlu0 1
        %1464 = vperm.xlu0 %1463, %v1454
        %v1465 = vpop.permute.xlu0 %1464
        %1468 = vset.pattern.permute.xlu0 1
        %1469 = vperm.xlu0 %1468, %v1455
        %v1470 = vpop.permute.xlu0 %1469
        %1473 = vset.pattern.permute.xlu0 1
        %1474 = vperm.xlu0 %1473, %v1456
        %v1475 = vpop.permute.xlu0 %1474
        %1478 = vset.pattern.permute.xlu0 1
        %1479 = vperm.xlu0 %1478, %v1457
        %v1480 = vpop.permute.xlu0 %1479
        %1483 = vset.pattern.permute.xlu0 1
        %1484 = vperm.xlu0 %1483, %v1458
        %v1485 = vpop.permute.xlu0 %1484
        %1488 = vset.pattern.permute.xlu0 1
        %1489 = vperm.xlu0 %1488, %v1459
        %v1490 = vpop.permute.xlu0 %1489
        %1493 = vset.pattern.permute.xlu0 1
        %1494 = vperm.xlu0 %1493, %v1460
        %v1495 = vpop.permute.xlu0 %1494
        %1498 = vset.pattern.permute.xlu0 1
        %1499 = vperm.xlu0 %1498, %v1461
        %v1500 = vpop.permute.xlu0 %1499
        %1502 = vset.pattern.permute.xlu0 0
        %1503 = vperm.xlu0 %1502, %v1454
        %v1504 = vpop.permute.xlu0 %1503
        %1506 = vset.pattern.permute.xlu0 0
        %1507 = vperm.xlu0 %1506, %v1455
        %v1508 = vpop.permute.xlu0 %1507
        %1510 = vset.pattern.permute.xlu0 0
        %1511 = vperm.xlu0 %1510, %v1456
        %v1512 = vpop.permute.xlu0 %1511
        %1514 = vset.pattern.permute.xlu0 0
        %1515 = vperm.xlu0 %1514, %v1457
        %v1516 = vpop.permute.xlu0 %1515
        %1518 = vset.pattern.permute.xlu0 0
        %1519 = vperm.xlu0 %1518, %v1458
        %v1520 = vpop.permute.xlu0 %1519
        %1522 = vset.pattern.permute.xlu0 0
        %1523 = vperm.xlu0 %1522, %v1459
        %v1524 = vpop.permute.xlu0 %1523
        %1526 = vset.pattern.permute.xlu0 0
        %1527 = vperm.xlu0 %1526, %v1460
        %v1528 = vpop.permute.xlu0 %1527
        %1530 = vset.pattern.permute.xlu0 0
        %1531 = vperm.xlu0 %1530, %v1461
        %v1532 = vpop.permute.xlu0 %1531
        %1534 = vset.pattern.permute.xlu0 2
        %1535 = vperm.xlu0 %1534, %v1454
        %v1536 = vpop.permute.xlu0 %1535
        %1538 = vset.pattern.permute.xlu0 2
        %1539 = vperm.xlu0 %1538, %v1455
        %v1540 = vpop.permute.xlu0 %1539
        %1542 = vset.pattern.permute.xlu0 2
        %1543 = vperm.xlu0 %1542, %v1456
        %v1544 = vpop.permute.xlu0 %1543
        %1546 = vset.pattern.permute.xlu0 2
        %1547 = vperm.xlu0 %1546, %v1457
        %v1548 = vpop.permute.xlu0 %1547
        %1550 = vset.pattern.permute.xlu0 2
        %1551 = vperm.xlu0 %1550, %v1458
        %v1552 = vpop.permute.xlu0 %1551
        %1554 = vset.pattern.permute.xlu0 2
        %1555 = vperm.xlu0 %1554, %v1459
        %v1556 = vpop.permute.xlu0 %1555
        %1558 = vset.pattern.permute.xlu0 2
        %1559 = vperm.xlu0 %1558, %v1460
        %v1560 = vpop.permute.xlu0 %1559
        %1562 = vset.pattern.permute.xlu0 2
        %1563 = vperm.xlu0 %1562, %v1461
        %v1564 = vpop.permute.xlu0 %1563
        %s1566 = sld [smem:[#allocation2 + $0x6]]
        %s1567 = sld [smem:[#allocation2 + $0x7]]
        %v1568 = vld [vmem:[%s186 + $0x1] sm:$0x1]
        %v1569 = vld [vmem:[%s186] sm:$0x1]
        %v1570 = vlaneseq
        %v1571 = vshrl.u32 %v1570, 7
        %v1572 = vsub.s32 0, %v1571
        %v1573 = vrot.slane %v1568, %v1572
        %v1574 = vmul.f32 %v1504, %v1573
        %v1575 = vmul.f32 %v1508, %v1573
        %v1576 = vmul.f32 %v1512, %v1573
        %v1577 = vmul.f32 %v1516, %v1573
        %v1578 = vmul.f32 %v1520, %v1573
        %v1579 = vmul.f32 %v1524, %v1573
        %v1580 = vmul.f32 %v1528, %v1573
        %v1581 = vmul.f32 %v1532, %v1573
        %v1582 = vadd.f32 %v1465, %v1574
        %v1583 = vadd.f32 %v1470, %v1575
        %v1584 = vadd.f32 %v1475, %v1576
        %v1585 = vadd.f32 %v1480, %v1577
        %v1586 = vadd.f32 %v1485, %v1578
        %v1587 = vadd.f32 %v1490, %v1579
        %v1588 = vadd.f32 %v1495, %v1580
        %v1589 = vadd.f32 %v1500, %v1581
        %v1590 = vmul.f32 %v1582, 0.01
        %v1591 = vmul.f32 %v1583, 0.01
        %v1592 = vmul.f32 %v1584, 0.01
        %v1593 = vmul.f32 %v1585, 0.01
        %v1594 = vmul.f32 %v1586, 0.01
        %v1595 = vmul.f32 %v1587, 0.01
        %v1596 = vmul.f32 %v1588, 0.01
        %v1597 = vmul.f32 %v1589, 0.01
        %v1598 = vmax.f32 %v1582, %v1590
        %v1599 = vmax.f32 %v1583, %v1591
        %v1600 = vmax.f32 %v1584, %v1592
        %v1601 = vmax.f32 %v1585, %v1593
        %v1602 = vmax.f32 %v1586, %v1594
        %v1603 = vmax.f32 %v1587, %v1595
        %v1604 = vmax.f32 %v1588, %v1596
        %v1605 = vmax.f32 %v1589, %v1597
        %v1606 = vmul.f32 %v1536, %v1598
        %v1607 = vmul.f32 %v1540, %v1599
        %v1608 = vmul.f32 %v1544, %v1600
        %v1609 = vmul.f32 %v1548, %v1601
        %v1610 = vadd.f32 %v1606, %v1607
        %v1611 = vadd.f32 %v1610, %v1608
        %v1612 = vadd.f32 %v1611, %v1609
        %v1613 = vrot.slane %v1612, 4
        %v1614 = vadd.f32 %v1612, %v1613
        %v1615 = vrot.slane %v1614, 2
        %v1616 = vadd.f32 %v1614, %v1615
        %v1617 = vrot.slane %v1616, 1
        %v1618 = vadd.f32 %v1616, %v1617
        %v1619 = vstv %s1566
        %v1620 = vadd.f32 %v1618, %v1619
        %v1621 = vmul.f32 %v1552, %v1602
        %v1622 = vmul.f32 %v1556, %v1603
        %v1623 = vmul.f32 %v1560, %v1604
        %v1624 = vmul.f32 %v1564, %v1605
        %v1625 = vadd.f32 %v1621, %v1622
        %v1626 = vadd.f32 %v1625, %v1623
        %v1627 = vadd.f32 %v1626, %v1624
        %v1628 = vrot.slane %v1627, 4
        %v1629 = vadd.f32 %v1627, %v1628
        %v1630 = vrot.slane %v1629, 2
        %v1631 = vadd.f32 %v1629, %v1630
        %v1632 = vrot.slane %v1631, 1
        %v1633 = vadd.f32 %v1631, %v1632
        %v1634 = vstv %s1567
        %v1635 = vadd.f32 %v1633, %v1634
        %v1636 = vmul.f32 %v1620, 1.442695
        %v1637 = vpow.pop %v1636
        %v1638 = vmul.f32 %v1569, %v1637
        %v1639 = vadd.f32 %v1638, %v1635
        %1640 = vst [vmem:[%s186] sm:$0x1] %v1639
        %v1641 = vld [vmem:[%s186 + $0x3] sm:$0x1]
        %v1642 = vadd.f32 %v1641, %v1620
        %1643 = vst [vmem:[%s186 + $0x3] sm:$0x1] %v1642
        %v1644 = vld [vmem:[%s186 + $0x5] sm:$0x1]
        %v1645 = vld [vmem:[%s186 + $0x4] sm:$0x1]
        %v1646 = vlaneseq
        %v1647 = vshrl.u32 %v1646, 7
        %v1648 = vsub.s32 0, %v1647
        %v1649 = vrot.slane %v1644, %v1648
        %v1650 = vmul.f32 %v1504, %v1649
        %v1651 = vmul.f32 %v1508, %v1649
        %v1652 = vmul.f32 %v1512, %v1649
        %v1653 = vmul.f32 %v1516, %v1649
        %v1654 = vmul.f32 %v1520, %v1649
        %v1655 = vmul.f32 %v1524, %v1649
        %v1656 = vmul.f32 %v1528, %v1649
        %v1657 = vmul.f32 %v1532, %v1649
        %v1658 = vadd.f32 %v1465, %v1650
        %v1659 = vadd.f32 %v1470, %v1651
        %v1660 = vadd.f32 %v1475, %v1652
        %v1661 = vadd.f32 %v1480, %v1653
        %v1662 = vadd.f32 %v1485, %v1654
        %v1663 = vadd.f32 %v1490, %v1655
        %v1664 = vadd.f32 %v1495, %v1656
        %v1665 = vadd.f32 %v1500, %v1657
        %v1666 = vmul.f32 %v1658, 0.01
        %v1667 = vmul.f32 %v1659, 0.01
        %v1668 = vmul.f32 %v1660, 0.01
        %v1669 = vmul.f32 %v1661, 0.01
        %v1670 = vmul.f32 %v1662, 0.01
        %v1671 = vmul.f32 %v1663, 0.01
        %v1672 = vmul.f32 %v1664, 0.01
        %v1673 = vmul.f32 %v1665, 0.01
        %v1674 = vmax.f32 %v1658, %v1666
        %v1675 = vmax.f32 %v1659, %v1667
        %v1676 = vmax.f32 %v1660, %v1668
        %v1677 = vmax.f32 %v1661, %v1669
        %v1678 = vmax.f32 %v1662, %v1670
        %v1679 = vmax.f32 %v1663, %v1671
        %v1680 = vmax.f32 %v1664, %v1672
        %v1681 = vmax.f32 %v1665, %v1673
        %v1682 = vmul.f32 %v1536, %v1674
        %v1683 = vmul.f32 %v1540, %v1675
        %v1684 = vmul.f32 %v1544, %v1676
        %v1685 = vmul.f32 %v1548, %v1677
        %v1686 = vadd.f32 %v1682, %v1683
        %v1687 = vadd.f32 %v1686, %v1684
        %v1688 = vadd.f32 %v1687, %v1685
        %v1689 = vrot.slane %v1688, 4
        %v1690 = vadd.f32 %v1688, %v1689
        %v1691 = vrot.slane %v1690, 2
        %v1692 = vadd.f32 %v1690, %v1691
        %v1693 = vrot.slane %v1692, 1
        %v1694 = vadd.f32 %v1692, %v1693
        %v1695 = vadd.f32 %v1694, %v1619
        %v1696 = vmul.f32 %v1552, %v1678
        %v1697 = vmul.f32 %v1556, %v1679
        %v1698 = vmul.f32 %v1560, %v1680
        %v1699 = vmul.f32 %v1564, %v1681
        %v1700 = vadd.f32 %v1696, %v1697
        %v1701 = vadd.f32 %v1700, %v1698
        %v1702 = vadd.f32 %v1701, %v1699
        %v1703 = vrot.slane %v1702, 4
        %v1704 = vadd.f32 %v1702, %v1703
        %v1705 = vrot.slane %v1704, 2
        %v1706 = vadd.f32 %v1704, %v1705
        %v1707 = vrot.slane %v1706, 1
        %v1708 = vadd.f32 %v1706, %v1707
        %v1709 = vadd.f32 %v1708, %v1634
        %v1710 = vmul.f32 %v1695, 1.442695
        %v1711 = vpow.pop %v1710
        %v1712 = vmul.f32 %v1645, %v1711
        %v1713 = vadd.f32 %v1712, %v1709
        %1714 = vst [vmem:[%s186 + $0x4] sm:$0x1] %v1713
        %v1715 = vld [vmem:[%s186 + $0x7] sm:$0x1]
        %v1716 = vadd.f32 %v1715, %v1695
        %1717 = vst [vmem:[%s186 + $0x7] sm:$0x1] %v1716
        %v1718 = vld [vmem:[%s186 + $0x9] sm:$0x1]
        %v1719 = vld [vmem:[%s186 + $0x8] sm:$0x1]
        %v1720 = vlaneseq
        %v1721 = vshrl.u32 %v1720, 7
        %v1722 = vsub.s32 0, %v1721
        %v1723 = vrot.slane %v1718, %v1722
        %v1724 = vmul.f32 %v1504, %v1723
        %v1725 = vmul.f32 %v1508, %v1723
        %v1726 = vmul.f32 %v1512, %v1723
        %v1727 = vmul.f32 %v1516, %v1723
        %v1728 = vmul.f32 %v1520, %v1723
        %v1729 = vmul.f32 %v1524, %v1723
        %v1730 = vmul.f32 %v1528, %v1723
        %v1731 = vmul.f32 %v1532, %v1723
        %v1732 = vadd.f32 %v1465, %v1724
        %v1733 = vadd.f32 %v1470, %v1725
        %v1734 = vadd.f32 %v1475, %v1726
        %v1735 = vadd.f32 %v1480, %v1727
        %v1736 = vadd.f32 %v1485, %v1728
        %v1737 = vadd.f32 %v1490, %v1729
        %v1738 = vadd.f32 %v1495, %v1730
        %v1739 = vadd.f32 %v1500, %v1731
        %v1740 = vmul.f32 %v1732, 0.01
        %v1741 = vmul.f32 %v1733, 0.01
        %v1742 = vmul.f32 %v1734, 0.01
        %v1743 = vmul.f32 %v1735, 0.01
        %v1744 = vmul.f32 %v1736, 0.01
        %v1745 = vmul.f32 %v1737, 0.01
        %v1746 = vmul.f32 %v1738, 0.01
        %v1747 = vmul.f32 %v1739, 0.01
        %v1748 = vmax.f32 %v1732, %v1740
        %v1749 = vmax.f32 %v1733, %v1741
        %v1750 = vmax.f32 %v1734, %v1742
        %v1751 = vmax.f32 %v1735, %v1743
        %v1752 = vmax.f32 %v1736, %v1744
        %v1753 = vmax.f32 %v1737, %v1745
        %v1754 = vmax.f32 %v1738, %v1746
        %v1755 = vmax.f32 %v1739, %v1747
        %v1756 = vmul.f32 %v1536, %v1748
        %v1757 = vmul.f32 %v1540, %v1749
        %v1758 = vmul.f32 %v1544, %v1750
        %v1759 = vmul.f32 %v1548, %v1751
        %v1760 = vadd.f32 %v1756, %v1757
        %v1761 = vadd.f32 %v1760, %v1758
        %v1762 = vadd.f32 %v1761, %v1759
        %v1763 = vrot.slane %v1762, 4
        %v1764 = vadd.f32 %v1762, %v1763
        %v1765 = vrot.slane %v1764, 2
        %v1766 = vadd.f32 %v1764, %v1765
        %v1767 = vrot.slane %v1766, 1
        %v1768 = vadd.f32 %v1766, %v1767
        %v1769 = vadd.f32 %v1768, %v1619
        %v1770 = vmul.f32 %v1552, %v1752
        %v1771 = vmul.f32 %v1556, %v1753
        %v1772 = vmul.f32 %v1560, %v1754
        %v1773 = vmul.f32 %v1564, %v1755
        %v1774 = vadd.f32 %v1770, %v1771
        %v1775 = vadd.f32 %v1774, %v1772
        %v1776 = vadd.f32 %v1775, %v1773
        %v1777 = vrot.slane %v1776, 4
        %v1778 = vadd.f32 %v1776, %v1777
        %v1779 = vrot.slane %v1778, 2
        %v1780 = vadd.f32 %v1778, %v1779
        %v1781 = vrot.slane %v1780, 1
        %v1782 = vadd.f32 %v1780, %v1781
        %v1783 = vadd.f32 %v1782, %v1634
        %v1784 = vmul.f32 %v1769, 1.442695
        %v1785 = vpow.pop %v1784
        %v1786 = vmul.f32 %v1719, %v1785
        %v1787 = vadd.f32 %v1786, %v1783
        %1788 = vst [vmem:[%s186 + $0x8] sm:$0x1] %v1787
        %v1789 = vld [vmem:[%s186 + $0xb] sm:$0x1]
        %v1790 = vadd.f32 %v1789, %v1769
        %1791 = vst [vmem:[%s186 + $0xb] sm:$0x1] %v1790
        %v1792 = vld [vmem:[%s186 + $0xd] sm:$0x1]
        %v1793 = vld [vmem:[%s186 + $0xc] sm:$0x1]
        %v1794 = vlaneseq
        %v1795 = vshrl.u32 %v1794, 7
        %v1796 = vsub.s32 0, %v1795
        %v1797 = vrot.slane %v1792, %v1796
        %v1798 = vmul.f32 %v1504, %v1797
        %v1799 = vmul.f32 %v1508, %v1797
        %v1800 = vmul.f32 %v1512, %v1797
        %v1801 = vmul.f32 %v1516, %v1797
        %v1802 = vmul.f32 %v1520, %v1797
        %v1803 = vmul.f32 %v1524, %v1797
        %v1804 = vmul.f32 %v1528, %v1797
        %v1805 = vmul.f32 %v1532, %v1797
        %v1806 = vadd.f32 %v1465, %v1798
        %v1807 = vadd.f32 %v1470, %v1799
        %v1808 = vadd.f32 %v1475, %v1800
        %v1809 = vadd.f32 %v1480, %v1801
        %v1810 = vadd.f32 %v1485, %v1802
        %v1811 = vadd.f32 %v1490, %v1803
        %v1812 = vadd.f32 %v1495, %v1804
        %v1813 = vadd.f32 %v1500, %v1805
        %v1814 = vmul.f32 %v1806, 0.01
        %v1815 = vmul.f32 %v1807, 0.01
        %v1816 = vmul.f32 %v1808, 0.01
        %v1817 = vmul.f32 %v1809, 0.01
        %v1818 = vmul.f32 %v1810, 0.01
        %v1819 = vmul.f32 %v1811, 0.01
        %v1820 = vmul.f32 %v1812, 0.01
        %v1821 = vmul.f32 %v1813, 0.01
        %v1822 = vmax.f32 %v1806, %v1814
        %v1823 = vmax.f32 %v1807, %v1815
        %v1824 = vmax.f32 %v1808, %v1816
        %v1825 = vmax.f32 %v1809, %v1817
        %v1826 = vmax.f32 %v1810, %v1818
        %v1827 = vmax.f32 %v1811, %v1819
        %v1828 = vmax.f32 %v1812, %v1820
        %v1829 = vmax.f32 %v1813, %v1821
        %v1830 = vmul.f32 %v1536, %v1822
        %v1831 = vmul.f32 %v1540, %v1823
        %v1832 = vmul.f32 %v1544, %v1824
        %v1833 = vmul.f32 %v1548, %v1825
        %v1834 = vadd.f32 %v1830, %v1831
        %v1835 = vadd.f32 %v1834, %v1832
        %v1836 = vadd.f32 %v1835, %v1833
        %v1837 = vrot.slane %v1836, 4
        %v1838 = vadd.f32 %v1836, %v1837
        %v1839 = vrot.slane %v1838, 2
        %v1840 = vadd.f32 %v1838, %v1839
        %v1841 = vrot.slane %v1840, 1
        %v1842 = vadd.f32 %v1840, %v1841
        %v1843 = vadd.f32 %v1842, %v1619
        %v1844 = vmul.f32 %v1552, %v1826
        %v1845 = vmul.f32 %v1556, %v1827
        %v1846 = vmul.f32 %v1560, %v1828
        %v1847 = vmul.f32 %v1564, %v1829
        %v1848 = vadd.f32 %v1844, %v1845
        %v1849 = vadd.f32 %v1848, %v1846
        %v1850 = vadd.f32 %v1849, %v1847
        %v1851 = vrot.slane %v1850, 4
        %v1852 = vadd.f32 %v1850, %v1851
        %v1853 = vrot.slane %v1852, 2
        %v1854 = vadd.f32 %v1852, %v1853
        %v1855 = vrot.slane %v1854, 1
        %v1856 = vadd.f32 %v1854, %v1855
        %v1857 = vadd.f32 %v1856, %v1634
        %v1858 = vmul.f32 %v1843, 1.442695
        %v1859 = vpow.pop %v1858
        %v1860 = vmul.f32 %v1793, %v1859
        %v1861 = vadd.f32 %v1860, %v1857
        %1862 = vst [vmem:[%s186 + $0xc] sm:$0x1] %v1861
        %v1863 = vld [vmem:[%s186 + $0xf] sm:$0x1]
        %v1864 = vadd.f32 %v1863, %v1843
        %1865 = vst [vmem:[%s186 + $0xf] sm:$0x1] %v1864
        %v1866 = vld [vmem:[%s186] sm:$0x3]
        %v1867 = vmul.f32 %v1866, %v1866
        %vm1868 = vcmask 1041408
        %v1869 = vsel %vm1868, %v1867, 0.0
        %v1870 = vrot.slane %v1869, 4
        %v1871 = vadd.f32 %v1869, %v1870
        %v1872 = vrot.slane %v1871, 2
        %v1873 = vadd.f32 %v1871, %v1872
        %v1874 = vrot.slane %v1873, 1
        %v1875 = vadd.f32 %v1873, %v1874
        %v1876 = vmul.f32 %v1875, 0.5
        %v1877 = vsub.f32 -1.837877, %v1876
        %1878 = vst [vmem:[%s186 + $0x2] sm:$0x1] %v1877
        %v1879 = vld [vmem:[%s186 + $0x4] sm:$0x3]
        %v1880 = vmul.f32 %v1879, %v1879
        %v1881 = vsel %vm1868, %v1880, 0.0
        %v1882 = vrot.slane %v1881, 4
        %v1883 = vadd.f32 %v1881, %v1882
        %v1884 = vrot.slane %v1883, 2
        %v1885 = vadd.f32 %v1883, %v1884
        %v1886 = vrot.slane %v1885, 1
        %v1887 = vadd.f32 %v1885, %v1886
        %v1888 = vmul.f32 %v1887, 0.5
        %v1889 = vsub.f32 -1.837877, %v1888
        %1890 = vst [vmem:[%s186 + $0x6] sm:$0x1] %v1889
        %v1891 = vld [vmem:[%s186 + $0x8] sm:$0x3]
        %v1892 = vmul.f32 %v1891, %v1891
        %v1893 = vsel %vm1868, %v1892, 0.0
        %v1894 = vrot.slane %v1893, 4
        %v1895 = vadd.f32 %v1893, %v1894
        %v1896 = vrot.slane %v1895, 2
        %v1897 = vadd.f32 %v1895, %v1896
        %v1898 = vrot.slane %v1897, 1
        %v1899 = vadd.f32 %v1897, %v1898
        %v1900 = vmul.f32 %v1899, 0.5
        %v1901 = vsub.f32 -1.837877, %v1900
        %1902 = vst [vmem:[%s186 + $0xa] sm:$0x1] %v1901
        %v1903 = vld [vmem:[%s186 + $0xc] sm:$0x3]
        %v1904 = vmul.f32 %v1903, %v1903
        %v1905 = vsel %vm1868, %v1904, 0.0
        %v1906 = vrot.slane %v1905, 4
        %v1907 = vadd.f32 %v1905, %v1906
        %v1908 = vrot.slane %v1907, 2
        %v1909 = vadd.f32 %v1907, %v1908
        %v1910 = vrot.slane %v1909, 1
        %v1911 = vadd.f32 %v1909, %v1910
        %v1912 = vmul.f32 %v1911, 0.5
        %v1913 = vsub.f32 -1.837877, %v1912
        %1914 = vst [vmem:[%s186 + $0xe] sm:$0x1] %v1913
        %s1915 = smul.u32 4, %s15
        %p1916 = scmp.lt.s32.totalorder %s1915, 7
        %s1917 = scalar_select %p1916, %s1915, 7
        %s1918 = smul.addr %s1917, 4
        %s1919 = scalar_lea.vmem %s3, %s1918
        // Predicated region
        $region37: #{stacked_nvp_forward.1} parent=31 // pred_check
          %p1920 = pneg %p101
        $region38: #{stacked_nvp_forward.1} parent=31 // pred_check_branch
          %1922 = sbr.rel (%p1920) target = $region40
        $region39: #{stacked_nvp_forward.1} parent=31 // pred_region
          %s1923 = smul.u32 4, %s15
        $region40: #{stacked_nvp_forward.1} parent=31 // pred_fallthru
          _
      $region32: #{stacked_nvp_forward.1} parent=5 // pred_fallthru
        _
      %p1924 = scmp.le.s32.totalorder 2, %s10
      // Predicated region
      $region41: #{stacked_nvp_forward.1} parent=5 // pred_check
        %p1925 = pneg %p1924
      $region42: #{stacked_nvp_forward.1} parent=5 // pred_check_branch
        %1927 = sbr.rel (%p1925) target = $region44
      $region43: #{stacked_nvp_forward.1} parent=5 // pred_region
        %s1928 = ssub.s32 %s10, 2
        // Predicated region
        $region45: #{stacked_nvp_forward.1} parent=43 // pred_check
          %p1929 = pneg %p107
        $region46: #{stacked_nvp_forward.1} parent=43 // pred_check_branch
          %1931 = sbr.rel (%p1929) target = $region48
        $region47: #{stacked_nvp_forward.1} parent=43 // pred_region
          %s1932 = smul.u32 4, %s16
          %p1933 = scmp.lt.s32.totalorder %s1932, 7
          %s1934 = scalar_select %p1933, %s1932, 7
          %s1935 = smul.addr %s1934, 4
          %s1936 = scalar_lea.vmem %s3, %s1935
        $region48: #{stacked_nvp_forward.1} parent=43 // pred_fallthru
          _
      $region44: #{stacked_nvp_forward.1} parent=5 // pred_fallthru
        _
    $region6: #{stacked_nvp_forward.1} parent=1 // loop_footer
      %s14 = sadd.s32 1, %s10
    $region7: #{stacked_nvp_forward.1} parent=1 // loop_footer_branch
      %9 = sbr.rel target = $region3
    $region8: #{stacked_nvp_forward.1} parent=1 // loop_exit
      _
    %1937 = vsyncpa [#allocation3], 1
    %s1938 = scalar_lea.sflag [#allocation3], 1
    %1939 = vsyncpa %s1938, 1

</llo_original>
